<compile_context>
chip_gen: v7x
topology: tpu7x:2x2x1
jax: 0.10.0
libtpu: 0.0.40
codegen_flags: <defaults>
</compile_context>

<pallas_src>
import jax
import jax.numpy as jnp
from jax.experimental import pallas as pl
from jax.experimental.pallas import tpu as pltpu


def gru_fc_kernel(x_ref,
                  wih_r_ref, wih_z_ref, wih_n_ref,
                  whh_r_ref, whh_z_ref, whh_n_ref,
                  b_r_ref, b_z_ref, b_in_ref, b_hn_ref,
                  fcw_ref, fcb_ref,
                  out_ref):
    seq_len = x_ref.shape[0]
    H = whh_r_ref.shape[0]
    w_dtype = wih_r_ref.dtype

    # One-time cast of the input slab to the weight dtype (bf16 on the MXU), f32 accumulate.
    x = x_ref[...].astype(w_dtype)

    # Hoisted input-side projections for all timesteps (off the serial critical path).
    gi_r = jnp.dot(x, wih_r_ref[...], preferred_element_type=jnp.float32) + b_r_ref[...]
    gi_z = jnp.dot(x, wih_z_ref[...], preferred_element_type=jnp.float32) + b_z_ref[...]
    gi_n = jnp.dot(x, wih_n_ref[...], preferred_element_type=jnp.float32) + b_in_ref[...]

    whh_r = whh_r_ref[...]
    whh_z = whh_z_ref[...]
    whh_n = whh_n_ref[...]
    b_hn = b_hn_ref[...]

    h = jnp.zeros((1, H), jnp.float32)
    # Fully unrolled serial recurrence (seq_len is a static trace-time constant).
    for t in range(seq_len):
        hc = h.astype(w_dtype)
        gh_r = jnp.dot(hc, whh_r, preferred_element_type=jnp.float32)
        gh_z = jnp.dot(hc, whh_z, preferred_element_type=jnp.float32)
        gh_n = jnp.dot(hc, whh_n, preferred_element_type=jnp.float32)
        r = jax.nn.sigmoid(gi_r[t:t + 1, :] + gh_r)
        z = jax.nn.sigmoid(gi_z[t:t + 1, :] + gh_z)
        n = jnp.tanh(gi_n[t:t + 1, :] + r * (gh_n + b_hn))
        h = (1.0 - z) * n + z * h

    # Final Linear on the last hidden state: (1, H) @ (H, O) + (1, O).
    out_ref[...] = (jnp.dot(h.astype(fcw_ref.dtype), fcw_ref[...],
                            preferred_element_type=jnp.float32) + fcb_ref[...])


def gru_model_forward(x, params, *, weight_dtype=jnp.bfloat16):
    """x: (seq_len, 1, input_size) float32  ->  (1, output_size) float32."""
    seq_len, batch, input_size = x.shape
    assert batch == 1, "module is defined for batch=1 (hidden.squeeze(0) -> (1, H))"

    w_ih, w_hh, b_ih, b_hh, fc_w, fc_b = params
    H = w_hh.shape[1]
    O = fc_w.shape[0]

    x2 = x.reshape(seq_len, input_size).astype(jnp.float32)

    # Per-gate, pre-transposed weights (PyTorch gate order [r, z, n]).
    def split_t(w):  # (3H, D) -> three (D, H)
        return w[0:H].T, w[H:2 * H].T, w[2 * H:3 * H].T

    wih_r, wih_z, wih_n = tuple(m.astype(weight_dtype) for m in split_t(w_ih))
    whh_r, whh_z, whh_n = tuple(m.astype(weight_dtype) for m in split_t(w_hh))

    # Fold b_ih + b_hh for r / z gates; b_hn stays separate (it is multiplied by r).
    b_r = (b_ih[0:H] + b_hh[0:H]).reshape(1, H).astype(jnp.float32)
    b_z = (b_ih[H:2 * H] + b_hh[H:2 * H]).reshape(1, H).astype(jnp.float32)
    b_in = b_ih[2 * H:3 * H].reshape(1, H).astype(jnp.float32)
    b_hn = b_hh[2 * H:3 * H].reshape(1, H).astype(jnp.float32)

    fcw = fc_w.T.astype(weight_dtype)            # (H, O)
    fcb = fc_b.reshape(1, O).astype(jnp.float32)

    inputs = (x2,
              wih_r, wih_z, wih_n,
              whh_r, whh_z, whh_n,
              b_r, b_z, b_in, b_hn,
              fcw, fcb)

    vmem_spec = pl.BlockSpec(memory_space=pltpu.MemorySpace.VMEM)
    out = pl.pallas_call(
        gru_fc_kernel,
        out_shape=jax.ShapeDtypeStruct((1, O), jnp.float32),
        in_specs=[vmem_spec] * len(inputs),
        out_specs=vmem_spec,
    )(*inputs)
    return out


def init_params(key, input_size, hidden_size, output_size):
    """Deterministic init matching PyTorch shapes (uniform(-1/sqrt(H), 1/sqrt(H)))."""
    ks = jax.random.split(key, 6)
    k_gru = 1.0 / jnp.sqrt(hidden_size)
    k_fc = 1.0 / jnp.sqrt(hidden_size)
    w_ih = jax.random.uniform(ks[0], (3 * hidden_size, input_size), jnp.float32, -k_gru, k_gru)
    w_hh = jax.random.uniform(ks[1], (3 * hidden_size, hidden_size), jnp.float32, -k_gru, k_gru)
    b_ih = jax.random.uniform(ks[2], (3 * hidden_size,), jnp.float32, -k_gru, k_gru)
    b_hh = jax.random.uniform(ks[3], (3 * hidden_size,), jnp.float32, -k_gru, k_gru)
    fc_w = jax.random.uniform(ks[4], (output_size, hidden_size), jnp.float32, -k_fc, k_fc)
    fc_b = jax.random.uniform(ks[5], (output_size,), jnp.float32, -k_fc, k_fc)
    return (w_ih, w_hh, b_ih, b_hh, fc_w, fc_b)


def reference_forward(x, params):
    """Pure-JAX reference of the PyTorch GRUModel.forward for validation."""
    w_ih, w_hh, b_ih, b_hh, fc_w, fc_b = params
    seq_len, _, input_size = x.shape
    H = w_hh.shape[1]
    h = jnp.zeros((1, H), jnp.float32)
    for t in range(seq_len):
        x_t = x[t]                                   # (1, I)
        gi = x_t @ w_ih.T + b_ih
        gh = h @ w_hh.T + b_hh
        r = jax.nn.sigmoid(gi[:, :H] + gh[:, :H])
        z = jax.nn.sigmoid(gi[:, H:2 * H] + gh[:, H:2 * H])
        n = jnp.tanh(gi[:, 2 * H:] + r * gh[:, 2 * H:])
        h = (1.0 - z) * n + z * h
    return h @ fc_w.T + fc_b


if __name__ == "__main__":
    seq_len, input_size, hidden_size, output_size = 8, 16, 32, 8

    key = jax.random.PRNGKey(0)
    k_x, k_p = jax.random.split(key)
    x = jax.random.normal(k_x, (seq_len, 1, input_size), jnp.float32)
    params = init_params(k_p, input_size, hidden_size, output_size)

    ref = reference_forward(x, params)

    # Exact-semantics check with f32 weights.
    out_f32 = jax.block_until_ready(gru_model_forward(x, params, weight_dtype=jnp.float32))
    assert out_f32.shape == (1, output_size)
    assert jnp.allclose(out_f32, ref, atol=1e-5, rtol=1e-5), (out_f32, ref)

    # Performance configuration: bf16 weights on the MXU, f32 accumulation / activations.
    out_bf16 = jax.block_until_ready(gru_model_forward(x, params))
    assert out_bf16.shape == (1, output_size)
    assert jnp.allclose(out_bf16, ref, atol=5e-2, rtol=5e-2), (out_bf16, ref)

    print("KERNEL_OK")
</pallas_src>

<mosaic_0001>
module attributes {stable_mosaic.version = 11 : i64} {
  func.func @gru_fc_kernel(%arg0: memref<8x16xf32, #tpu.memory_space<vmem>>, %arg1: memref<16x32xf32, #tpu.memory_space<vmem>>, %arg2: memref<16x32xf32, #tpu.memory_space<vmem>>, %arg3: memref<16x32xf32, #tpu.memory_space<vmem>>, %arg4: memref<32x32xf32, #tpu.memory_space<vmem>>, %arg5: memref<32x32xf32, #tpu.memory_space<vmem>>, %arg6: memref<32x32xf32, #tpu.memory_space<vmem>>, %arg7: memref<1x32xf32, #tpu.memory_space<vmem>>, %arg8: memref<1x32xf32, #tpu.memory_space<vmem>>, %arg9: memref<1x32xf32, #tpu.memory_space<vmem>>, %arg10: memref<1x32xf32, #tpu.memory_space<vmem>>, %arg11: memref<32x8xf32, #tpu.memory_space<vmem>>, %arg12: memref<1x8xf32, #tpu.memory_space<vmem>>, %arg13: memref<1x8xf32, #tpu.memory_space<vmem>>) attributes {dimension_semantics = [], scalar_prefetch = 0 : i64, scratch_operands = 0 : i64, tpu.core_type = #tpu.core_type<tc>} {
    %c0 = arith.constant 0 : index
    %c0_0 = arith.constant 0 : index
    %0 = vector.load %arg0[%c0, %c0_0] : memref<8x16xf32, #tpu.memory_space<vmem>>, vector<8x16xf32>
    %c0_1 = arith.constant 0 : index
    %c0_2 = arith.constant 0 : index
    %1 = vector.load %arg1[%c0_1, %c0_2] : memref<16x32xf32, #tpu.memory_space<vmem>>, vector<16x32xf32>
    %cst = arith.constant dense<0.000000e+00> : vector<8x32xf32>
    %2 = tpu.matmul %0, %1, %cst {dimension_numbers = #tpu.dot_dimension_numbers<[1], [0], [0], [1], [0, 0, 1, 1], [], []>} : vector<8x16xf32>, vector<16x32xf32>, vector<8x32xf32> -> vector<8x32xf32>
    %c0_3 = arith.constant 0 : index
    %c0_4 = arith.constant 0 : index
    %3 = vector.load %arg7[%c0_3, %c0_4] : memref<1x32xf32, #tpu.memory_space<vmem>>, vector<1x32xf32>
    %4 = vector.broadcast %3 : vector<1x32xf32> to vector<8x32xf32>
    %5 = arith.addf %2, %4 : vector<8x32xf32>
    %c0_5 = arith.constant 0 : index
    %c0_6 = arith.constant 0 : index
    %6 = vector.load %arg2[%c0_5, %c0_6] : memref<16x32xf32, #tpu.memory_space<vmem>>, vector<16x32xf32>
    %cst_7 = arith.constant dense<0.000000e+00> : vector<8x32xf32>
    %7 = tpu.matmul %0, %6, %cst_7 {dimension_numbers = #tpu.dot_dimension_numbers<[1], [0], [0], [1], [0, 0, 1, 1], [], []>} : vector<8x16xf32>, vector<16x32xf32>, vector<8x32xf32> -> vector<8x32xf32>
    %c0_8 = arith.constant 0 : index
    %c0_9 = arith.constant 0 : index
    %8 = vector.load %arg8[%c0_8, %c0_9] : memref<1x32xf32, #tpu.memory_space<vmem>>, vector<1x32xf32>
    %9 = vector.broadcast %8 : vector<1x32xf32> to vector<8x32xf32>
    %10 = arith.addf %7, %9 : vector<8x32xf32>
    %c0_10 = arith.constant 0 : index
    %c0_11 = arith.constant 0 : index
    %11 = vector.load %arg3[%c0_10, %c0_11] : memref<16x32xf32, #tpu.memory_space<vmem>>, vector<16x32xf32>
    %cst_12 = arith.constant dense<0.000000e+00> : vector<8x32xf32>
    %12 = tpu.matmul %0, %11, %cst_12 {dimension_numbers = #tpu.dot_dimension_numbers<[1], [0], [0], [1], [0, 0, 1, 1], [], []>} : vector<8x16xf32>, vector<16x32xf32>, vector<8x32xf32> -> vector<8x32xf32>
    %c0_13 = arith.constant 0 : index
    %c0_14 = arith.constant 0 : index
    %13 = vector.load %arg9[%c0_13, %c0_14] : memref<1x32xf32, #tpu.memory_space<vmem>>, vector<1x32xf32>
    %14 = vector.broadcast %13 : vector<1x32xf32> to vector<8x32xf32>
    %15 = arith.addf %12, %14 : vector<8x32xf32>
    %c0_15 = arith.constant 0 : index
    %c0_16 = arith.constant 0 : index
    %16 = vector.load %arg4[%c0_15, %c0_16] : memref<32x32xf32, #tpu.memory_space<vmem>>, vector<32x32xf32>
    %c0_17 = arith.constant 0 : index
    %c0_18 = arith.constant 0 : index
    %17 = vector.load %arg5[%c0_17, %c0_18] : memref<32x32xf32, #tpu.memory_space<vmem>>, vector<32x32xf32>
    %c0_19 = arith.constant 0 : index
    %c0_20 = arith.constant 0 : index
    %18 = vector.load %arg6[%c0_19, %c0_20] : memref<32x32xf32, #tpu.memory_space<vmem>>, vector<32x32xf32>
    %c0_21 = arith.constant 0 : index
    %c0_22 = arith.constant 0 : index
    %19 = vector.load %arg10[%c0_21, %c0_22] : memref<1x32xf32, #tpu.memory_space<vmem>>, vector<1x32xf32>
    %cst_23 = arith.constant 0.000000e+00 : f32
    %20 = vector.broadcast %cst_23 : f32 to vector<1x32xf32>
    %cst_24 = arith.constant dense<0.000000e+00> : vector<1x32xf32>
    %21 = tpu.matmul %20, %16, %cst_24 {dimension_numbers = #tpu.dot_dimension_numbers<[1], [0], [0], [1], [0, 0, 1, 1], [], []>} : vector<1x32xf32>, vector<32x32xf32>, vector<1x32xf32> -> vector<1x32xf32>
    %cst_25 = arith.constant dense<0.000000e+00> : vector<1x32xf32>
    %22 = tpu.matmul %20, %17, %cst_25 {dimension_numbers = #tpu.dot_dimension_numbers<[1], [0], [0], [1], [0, 0, 1, 1], [], []>} : vector<1x32xf32>, vector<32x32xf32>, vector<1x32xf32> -> vector<1x32xf32>
    %cst_26 = arith.constant dense<0.000000e+00> : vector<1x32xf32>
    %23 = tpu.matmul %20, %18, %cst_26 {dimension_numbers = #tpu.dot_dimension_numbers<[1], [0], [0], [1], [0, 0, 1, 1], [], []>} : vector<1x32xf32>, vector<32x32xf32>, vector<1x32xf32> -> vector<1x32xf32>
    %24 = vector.extract_strided_slice %5 {offsets = [0, 0], sizes = [1, 32], strides = [1, 1]} : vector<8x32xf32> to vector<1x32xf32>
    %25 = arith.addf %24, %21 : vector<1x32xf32>
    %26 = arith.negf %25 : vector<1x32xf32>
    %27 = math.exp %26 : vector<1x32xf32>
    %cst_27 = arith.constant 1.000000e+00 : f32
    %28 = vector.broadcast %cst_27 : f32 to vector<1x32xf32>
    %29 = arith.addf %28, %27 : vector<1x32xf32>
    %30 = arith.divf %28, %29 : vector<1x32xf32>
    %31 = vector.extract_strided_slice %10 {offsets = [0, 0], sizes = [1, 32], strides = [1, 1]} : vector<8x32xf32> to vector<1x32xf32>
    %32 = arith.addf %31, %22 : vector<1x32xf32>
    %33 = arith.negf %32 : vector<1x32xf32>
    %34 = math.exp %33 : vector<1x32xf32>
    %cst_28 = arith.constant 1.000000e+00 : f32
    %35 = vector.broadcast %cst_28 : f32 to vector<1x32xf32>
    %36 = arith.addf %35, %34 : vector<1x32xf32>
    %37 = arith.divf %35, %36 : vector<1x32xf32>
    %38 = vector.extract_strided_slice %15 {offsets = [0, 0], sizes = [1, 32], strides = [1, 1]} : vector<8x32xf32> to vector<1x32xf32>
    %39 = arith.addf %23, %19 : vector<1x32xf32>
    %40 = arith.mulf %30, %39 : vector<1x32xf32>
    %41 = arith.addf %38, %40 : vector<1x32xf32>
    %42 = math.tanh %41 : vector<1x32xf32>
    %cst_29 = arith.constant 1.000000e+00 : f32
    %43 = vector.broadcast %cst_29 : f32 to vector<1x32xf32>
    %44 = arith.subf %43, %37 : vector<1x32xf32>
    %45 = arith.mulf %44, %42 : vector<1x32xf32>
    %46 = arith.mulf %37, %20 : vector<1x32xf32>
    %47 = arith.addf %45, %46 : vector<1x32xf32>
    %cst_30 = arith.constant dense<0.000000e+00> : vector<1x32xf32>
    %48 = tpu.matmul %47, %16, %cst_30 {dimension_numbers = #tpu.dot_dimension_numbers<[1], [0], [0], [1], [0, 0, 1, 1], [], []>} : vector<1x32xf32>, vector<32x32xf32>, vector<1x32xf32> -> vector<1x32xf32>
    %cst_31 = arith.constant dense<0.000000e+00> : vector<1x32xf32>
    %49 = tpu.matmul %47, %17, %cst_31 {dimension_numbers = #tpu.dot_dimension_numbers<[1], [0], [0], [1], [0, 0, 1, 1], [], []>} : vector<1x32xf32>, vector<32x32xf32>, vector<1x32xf32> -> vector<1x32xf32>
    %cst_32 = arith.constant dense<0.000000e+00> : vector<1x32xf32>
    %50 = tpu.matmul %47, %18, %cst_32 {dimension_numbers = #tpu.dot_dimension_numbers<[1], [0], [0], [1], [0, 0, 1, 1], [], []>} : vector<1x32xf32>, vector<32x32xf32>, vector<1x32xf32> -> vector<1x32xf32>
    %51 = vector.extract_strided_slice %5 {offsets = [1, 0], sizes = [1, 32], strides = [1, 1]} : vector<8x32xf32> to vector<1x32xf32>
    %52 = arith.addf %51, %48 : vector<1x32xf32>
    %53 = arith.negf %52 : vector<1x32xf32>
    %54 = math.exp %53 : vector<1x32xf32>
    %cst_33 = arith.constant 1.000000e+00 : f32
    %55 = vector.broadcast %cst_33 : f32 to vector<1x32xf32>
    %56 = arith.addf %55, %54 : vector<1x32xf32>
    %57 = arith.divf %55, %56 : vector<1x32xf32>
    %58 = vector.extract_strided_slice %10 {offsets = [1, 0], sizes = [1, 32], strides = [1, 1]} : vector<8x32xf32> to vector<1x32xf32>
    %59 = arith.addf %58, %49 : vector<1x32xf32>
    %60 = arith.negf %59 : vector<1x32xf32>
    %61 = math.exp %60 : vector<1x32xf32>
    %cst_34 = arith.constant 1.000000e+00 : f32
    %62 = vector.broadcast %cst_34 : f32 to vector<1x32xf32>
    %63 = arith.addf %62, %61 : vector<1x32xf32>
    %64 = arith.divf %62, %63 : vector<1x32xf32>
    %65 = vector.extract_strided_slice %15 {offsets = [1, 0], sizes = [1, 32], strides = [1, 1]} : vector<8x32xf32> to vector<1x32xf32>
    %66 = arith.addf %50, %19 : vector<1x32xf32>
    %67 = arith.mulf %57, %66 : vector<1x32xf32>
    %68 = arith.addf %65, %67 : vector<1x32xf32>
    %69 = math.tanh %68 : vector<1x32xf32>
    %cst_35 = arith.constant 1.000000e+00 : f32
    %70 = vector.broadcast %cst_35 : f32 to vector<1x32xf32>
    %71 = arith.subf %70, %64 : vector<1x32xf32>
    %72 = arith.mulf %71, %69 : vector<1x32xf32>
    %73 = arith.mulf %64, %47 : vector<1x32xf32>
    %74 = arith.addf %72, %73 : vector<1x32xf32>
    %cst_36 = arith.constant dense<0.000000e+00> : vector<1x32xf32>
    %75 = tpu.matmul %74, %16, %cst_36 {dimension_numbers = #tpu.dot_dimension_numbers<[1], [0], [0], [1], [0, 0, 1, 1], [], []>} : vector<1x32xf32>, vector<32x32xf32>, vector<1x32xf32> -> vector<1x32xf32>
    %cst_37 = arith.constant dense<0.000000e+00> : vector<1x32xf32>
    %76 = tpu.matmul %74, %17, %cst_37 {dimension_numbers = #tpu.dot_dimension_numbers<[1], [0], [0], [1], [0, 0, 1, 1], [], []>} : vector<1x32xf32>, vector<32x32xf32>, vector<1x32xf32> -> vector<1x32xf32>
    %cst_38 = arith.constant dense<0.000000e+00> : vector<1x32xf32>
    %77 = tpu.matmul %74, %18, %cst_38 {dimension_numbers = #tpu.dot_dimension_numbers<[1], [0], [0], [1], [0, 0, 1, 1], [], []>} : vector<1x32xf32>, vector<32x32xf32>, vector<1x32xf32> -> vector<1x32xf32>
    %78 = vector.extract_strided_slice %5 {offsets = [2, 0], sizes = [1, 32], strides = [1, 1]} : vector<8x32xf32> to vector<1x32xf32>
    %79 = arith.addf %78, %75 : vector<1x32xf32>
    %80 = arith.negf %79 : vector<1x32xf32>
    %81 = math.exp %80 : vector<1x32xf32>
    %cst_39 = arith.constant 1.000000e+00 : f32
    %82 = vector.broadcast %cst_39 : f32 to vector<1x32xf32>
    %83 = arith.addf %82, %81 : vector<1x32xf32>
    %84 = arith.divf %82, %83 : vector<1x32xf32>
    %85 = vector.extract_strided_slice %10 {offsets = [2, 0], sizes = [1, 32], strides = [1, 1]} : vector<8x32xf32> to vector<1x32xf32>
    %86 = arith.addf %85, %76 : vector<1x32xf32>
    %87 = arith.negf %86 : vector<1x32xf32>
    %88 = math.exp %87 : vector<1x32xf32>
    %cst_40 = arith.constant 1.000000e+00 : f32
    %89 = vector.broadcast %cst_40 : f32 to vector<1x32xf32>
    %90 = arith.addf %89, %88 : vector<1x32xf32>
    %91 = arith.divf %89, %90 : vector<1x32xf32>
    %92 = vector.extract_strided_slice %15 {offsets = [2, 0], sizes = [1, 32], strides = [1, 1]} : vector<8x32xf32> to vector<1x32xf32>
    %93 = arith.addf %77, %19 : vector<1x32xf32>
    %94 = arith.mulf %84, %93 : vector<1x32xf32>
    %95 = arith.addf %92, %94 : vector<1x32xf32>
    %96 = math.tanh %95 : vector<1x32xf32>
    %cst_41 = arith.constant 1.000000e+00 : f32
    %97 = vector.broadcast %cst_41 : f32 to vector<1x32xf32>
    %98 = arith.subf %97, %91 : vector<1x32xf32>
    %99 = arith.mulf %98, %96 : vector<1x32xf32>
    %100 = arith.mulf %91, %74 : vector<1x32xf32>
    %101 = arith.addf %99, %100 : vector<1x32xf32>
    %cst_42 = arith.constant dense<0.000000e+00> : vector<1x32xf32>
    %102 = tpu.matmul %101, %16, %cst_42 {dimension_numbers = #tpu.dot_dimension_numbers<[1], [0], [0], [1], [0, 0, 1, 1], [], []>} : vector<1x32xf32>, vector<32x32xf32>, vector<1x32xf32> -> vector<1x32xf32>
    %cst_43 = arith.constant dense<0.000000e+00> : vector<1x32xf32>
    %103 = tpu.matmul %101, %17, %cst_43 {dimension_numbers = #tpu.dot_dimension_numbers<[1], [0], [0], [1], [0, 0, 1, 1], [], []>} : vector<1x32xf32>, vector<32x32xf32>, vector<1x32xf32> -> vector<1x32xf32>
    %cst_44 = arith.constant dense<0.000000e+00> : vector<1x32xf32>
    %104 = tpu.matmul %101, %18, %cst_44 {dimension_numbers = #tpu.dot_dimension_numbers<[1], [0], [0], [1], [0, 0, 1, 1], [], []>} : vector<1x32xf32>, vector<32x32xf32>, vector<1x32xf32> -> vector<1x32xf32>
    %105 = vector.extract_strided_slice %5 {offsets = [3, 0], sizes = [1, 32], strides = [1, 1]} : vector<8x32xf32> to vector<1x32xf32>
    %106 = arith.addf %105, %102 : vector<1x32xf32>
    %107 = arith.negf %106 : vector<1x32xf32>
    %108 = math.exp %107 : vector<1x32xf32>
    %cst_45 = arith.constant 1.000000e+00 : f32
    %109 = vector.broadcast %cst_45 : f32 to vector<1x32xf32>
    %110 = arith.addf %109, %108 : vector<1x32xf32>
    %111 = arith.divf %109, %110 : vector<1x32xf32>
    %112 = vector.extract_strided_slice %10 {offsets = [3, 0], sizes = [1, 32], strides = [1, 1]} : vector<8x32xf32> to vector<1x32xf32>
    %113 = arith.addf %112, %103 : vector<1x32xf32>
    %114 = arith.negf %113 : vector<1x32xf32>
    %115 = math.exp %114 : vector<1x32xf32>
    %cst_46 = arith.constant 1.000000e+00 : f32
    %116 = vector.broadcast %cst_46 : f32 to vector<1x32xf32>
    %117 = arith.addf %116, %115 : vector<1x32xf32>
    %118 = arith.divf %116, %117 : vector<1x32xf32>
    %119 = vector.extract_strided_slice %15 {offsets = [3, 0], sizes = [1, 32], strides = [1, 1]} : vector<8x32xf32> to vector<1x32xf32>
    %120 = arith.addf %104, %19 : vector<1x32xf32>
    %121 = arith.mulf %111, %120 : vector<1x32xf32>
    %122 = arith.addf %119, %121 : vector<1x32xf32>
    %123 = math.tanh %122 : vector<1x32xf32>
    %cst_47 = arith.constant 1.000000e+00 : f32
    %124 = vector.broadcast %cst_47 : f32 to vector<1x32xf32>
    %125 = arith.subf %124, %118 : vector<1x32xf32>
    %126 = arith.mulf %125, %123 : vector<1x32xf32>
    %127 = arith.mulf %118, %101 : vector<1x32xf32>
    %128 = arith.addf %126, %127 : vector<1x32xf32>
    %cst_48 = arith.constant dense<0.000000e+00> : vector<1x32xf32>
    %129 = tpu.matmul %128, %16, %cst_48 {dimension_numbers = #tpu.dot_dimension_numbers<[1], [0], [0], [1], [0, 0, 1, 1], [], []>} : vector<1x32xf32>, vector<32x32xf32>, vector<1x32xf32> -> vector<1x32xf32>
    %cst_49 = arith.constant dense<0.000000e+00> : vector<1x32xf32>
    %130 = tpu.matmul %128, %17, %cst_49 {dimension_numbers = #tpu.dot_dimension_numbers<[1], [0], [0], [1], [0, 0, 1, 1], [], []>} : vector<1x32xf32>, vector<32x32xf32>, vector<1x32xf32> -> vector<1x32xf32>
    %cst_50 = arith.constant dense<0.000000e+00> : vector<1x32xf32>
    %131 = tpu.matmul %128, %18, %cst_50 {dimension_numbers = #tpu.dot_dimension_numbers<[1], [0], [0], [1], [0, 0, 1, 1], [], []>} : vector<1x32xf32>, vector<32x32xf32>, vector<1x32xf32> -> vector<1x32xf32>
    %132 = vector.extract_strided_slice %5 {offsets = [4, 0], sizes = [1, 32], strides = [1, 1]} : vector<8x32xf32> to vector<1x32xf32>
    %133 = arith.addf %132, %129 : vector<1x32xf32>
    %134 = arith.negf %133 : vector<1x32xf32>
    %135 = math.exp %134 : vector<1x32xf32>
    %cst_51 = arith.constant 1.000000e+00 : f32
    %136 = vector.broadcast %cst_51 : f32 to vector<1x32xf32>
    %137 = arith.addf %136, %135 : vector<1x32xf32>
    %138 = arith.divf %136, %137 : vector<1x32xf32>
    %139 = vector.extract_strided_slice %10 {offsets = [4, 0], sizes = [1, 32], strides = [1, 1]} : vector<8x32xf32> to vector<1x32xf32>
    %140 = arith.addf %139, %130 : vector<1x32xf32>
    %141 = arith.negf %140 : vector<1x32xf32>
    %142 = math.exp %141 : vector<1x32xf32>
    %cst_52 = arith.constant 1.000000e+00 : f32
    %143 = vector.broadcast %cst_52 : f32 to vector<1x32xf32>
    %144 = arith.addf %143, %142 : vector<1x32xf32>
    %145 = arith.divf %143, %144 : vector<1x32xf32>
    %146 = vector.extract_strided_slice %15 {offsets = [4, 0], sizes = [1, 32], strides = [1, 1]} : vector<8x32xf32> to vector<1x32xf32>
    %147 = arith.addf %131, %19 : vector<1x32xf32>
    %148 = arith.mulf %138, %147 : vector<1x32xf32>
    %149 = arith.addf %146, %148 : vector<1x32xf32>
    %150 = math.tanh %149 : vector<1x32xf32>
    %cst_53 = arith.constant 1.000000e+00 : f32
    %151 = vector.broadcast %cst_53 : f32 to vector<1x32xf32>
    %152 = arith.subf %151, %145 : vector<1x32xf32>
    %153 = arith.mulf %152, %150 : vector<1x32xf32>
    %154 = arith.mulf %145, %128 : vector<1x32xf32>
    %155 = arith.addf %153, %154 : vector<1x32xf32>
    %cst_54 = arith.constant dense<0.000000e+00> : vector<1x32xf32>
    %156 = tpu.matmul %155, %16, %cst_54 {dimension_numbers = #tpu.dot_dimension_numbers<[1], [0], [0], [1], [0, 0, 1, 1], [], []>} : vector<1x32xf32>, vector<32x32xf32>, vector<1x32xf32> -> vector<1x32xf32>
    %cst_55 = arith.constant dense<0.000000e+00> : vector<1x32xf32>
    %157 = tpu.matmul %155, %17, %cst_55 {dimension_numbers = #tpu.dot_dimension_numbers<[1], [0], [0], [1], [0, 0, 1, 1], [], []>} : vector<1x32xf32>, vector<32x32xf32>, vector<1x32xf32> -> vector<1x32xf32>
    %cst_56 = arith.constant dense<0.000000e+00> : vector<1x32xf32>
    %158 = tpu.matmul %155, %18, %cst_56 {dimension_numbers = #tpu.dot_dimension_numbers<[1], [0], [0], [1], [0, 0, 1, 1], [], []>} : vector<1x32xf32>, vector<32x32xf32>, vector<1x32xf32> -> vector<1x32xf32>
    %159 = vector.extract_strided_slice %5 {offsets = [5, 0], sizes = [1, 32], strides = [1, 1]} : vector<8x32xf32> to vector<1x32xf32>
    %160 = arith.addf %159, %156 : vector<1x32xf32>
    %161 = arith.negf %160 : vector<1x32xf32>
    %162 = math.exp %161 : vector<1x32xf32>
    %cst_57 = arith.constant 1.000000e+00 : f32
    %163 = vector.broadcast %cst_57 : f32 to vector<1x32xf32>
    %164 = arith.addf %163, %162 : vector<1x32xf32>
    %165 = arith.divf %163, %164 : vector<1x32xf32>
    %166 = vector.extract_strided_slice %10 {offsets = [5, 0], sizes = [1, 32], strides = [1, 1]} : vector<8x32xf32> to vector<1x32xf32>
    %167 = arith.addf %166, %157 : vector<1x32xf32>
    %168 = arith.negf %167 : vector<1x32xf32>
    %169 = math.exp %168 : vector<1x32xf32>
    %cst_58 = arith.constant 1.000000e+00 : f32
    %170 = vector.broadcast %cst_58 : f32 to vector<1x32xf32>
    %171 = arith.addf %170, %169 : vector<1x32xf32>
    %172 = arith.divf %170, %171 : vector<1x32xf32>
    %173 = vector.extract_strided_slice %15 {offsets = [5, 0], sizes = [1, 32], strides = [1, 1]} : vector<8x32xf32> to vector<1x32xf32>
    %174 = arith.addf %158, %19 : vector<1x32xf32>
    %175 = arith.mulf %165, %174 : vector<1x32xf32>
    %176 = arith.addf %173, %175 : vector<1x32xf32>
    %177 = math.tanh %176 : vector<1x32xf32>
    %cst_59 = arith.constant 1.000000e+00 : f32
    %178 = vector.broadcast %cst_59 : f32 to vector<1x32xf32>
    %179 = arith.subf %178, %172 : vector<1x32xf32>
    %180 = arith.mulf %179, %177 : vector<1x32xf32>
    %181 = arith.mulf %172, %155 : vector<1x32xf32>
    %182 = arith.addf %180, %181 : vector<1x32xf32>
    %cst_60 = arith.constant dense<0.000000e+00> : vector<1x32xf32>
    %183 = tpu.matmul %182, %16, %cst_60 {dimension_numbers = #tpu.dot_dimension_numbers<[1], [0], [0], [1], [0, 0, 1, 1], [], []>} : vector<1x32xf32>, vector<32x32xf32>, vector<1x32xf32> -> vector<1x32xf32>
    %cst_61 = arith.constant dense<0.000000e+00> : vector<1x32xf32>
    %184 = tpu.matmul %182, %17, %cst_61 {dimension_numbers = #tpu.dot_dimension_numbers<[1], [0], [0], [1], [0, 0, 1, 1], [], []>} : vector<1x32xf32>, vector<32x32xf32>, vector<1x32xf32> -> vector<1x32xf32>
    %cst_62 = arith.constant dense<0.000000e+00> : vector<1x32xf32>
    %185 = tpu.matmul %182, %18, %cst_62 {dimension_numbers = #tpu.dot_dimension_numbers<[1], [0], [0], [1], [0, 0, 1, 1], [], []>} : vector<1x32xf32>, vector<32x32xf32>, vector<1x32xf32> -> vector<1x32xf32>
    %186 = vector.extract_strided_slice %5 {offsets = [6, 0], sizes = [1, 32], strides = [1, 1]} : vector<8x32xf32> to vector<1x32xf32>
    %187 = arith.addf %186, %183 : vector<1x32xf32>
    %188 = arith.negf %187 : vector<1x32xf32>
    %189 = math.exp %188 : vector<1x32xf32>
    %cst_63 = arith.constant 1.000000e+00 : f32
    %190 = vector.broadcast %cst_63 : f32 to vector<1x32xf32>
    %191 = arith.addf %190, %189 : vector<1x32xf32>
    %192 = arith.divf %190, %191 : vector<1x32xf32>
    %193 = vector.extract_strided_slice %10 {offsets = [6, 0], sizes = [1, 32], strides = [1, 1]} : vector<8x32xf32> to vector<1x32xf32>
    %194 = arith.addf %193, %184 : vector<1x32xf32>
    %195 = arith.negf %194 : vector<1x32xf32>
    %196 = math.exp %195 : vector<1x32xf32>
    %cst_64 = arith.constant 1.000000e+00 : f32
    %197 = vector.broadcast %cst_64 : f32 to vector<1x32xf32>
    %198 = arith.addf %197, %196 : vector<1x32xf32>
    %199 = arith.divf %197, %198 : vector<1x32xf32>
    %200 = vector.extract_strided_slice %15 {offsets = [6, 0], sizes = [1, 32], strides = [1, 1]} : vector<8x32xf32> to vector<1x32xf32>
    %201 = arith.addf %185, %19 : vector<1x32xf32>
    %202 = arith.mulf %192, %201 : vector<1x32xf32>
    %203 = arith.addf %200, %202 : vector<1x32xf32>
    %204 = math.tanh %203 : vector<1x32xf32>
    %cst_65 = arith.constant 1.000000e+00 : f32
    %205 = vector.broadcast %cst_65 : f32 to vector<1x32xf32>
    %206 = arith.subf %205, %199 : vector<1x32xf32>
    %207 = arith.mulf %206, %204 : vector<1x32xf32>
    %208 = arith.mulf %199, %182 : vector<1x32xf32>
    %209 = arith.addf %207, %208 : vector<1x32xf32>
    %cst_66 = arith.constant dense<0.000000e+00> : vector<1x32xf32>
    %210 = tpu.matmul %209, %16, %cst_66 {dimension_numbers = #tpu.dot_dimension_numbers<[1], [0], [0], [1], [0, 0, 1, 1], [], []>} : vector<1x32xf32>, vector<32x32xf32>, vector<1x32xf32> -> vector<1x32xf32>
    %cst_67 = arith.constant dense<0.000000e+00> : vector<1x32xf32>
    %211 = tpu.matmul %209, %17, %cst_67 {dimension_numbers = #tpu.dot_dimension_numbers<[1], [0], [0], [1], [0, 0, 1, 1], [], []>} : vector<1x32xf32>, vector<32x32xf32>, vector<1x32xf32> -> vector<1x32xf32>
    %cst_68 = arith.constant dense<0.000000e+00> : vector<1x32xf32>
    %212 = tpu.matmul %209, %18, %cst_68 {dimension_numbers = #tpu.dot_dimension_numbers<[1], [0], [0], [1], [0, 0, 1, 1], [], []>} : vector<1x32xf32>, vector<32x32xf32>, vector<1x32xf32> -> vector<1x32xf32>
    %213 = vector.extract_strided_slice %5 {offsets = [7, 0], sizes = [1, 32], strides = [1, 1]} : vector<8x32xf32> to vector<1x32xf32>
    %214 = arith.addf %213, %210 : vector<1x32xf32>
    %215 = arith.negf %214 : vector<1x32xf32>
    %216 = math.exp %215 : vector<1x32xf32>
    %cst_69 = arith.constant 1.000000e+00 : f32
    %217 = vector.broadcast %cst_69 : f32 to vector<1x32xf32>
    %218 = arith.addf %217, %216 : vector<1x32xf32>
    %219 = arith.divf %217, %218 : vector<1x32xf32>
    %220 = vector.extract_strided_slice %10 {offsets = [7, 0], sizes = [1, 32], strides = [1, 1]} : vector<8x32xf32> to vector<1x32xf32>
    %221 = arith.addf %220, %211 : vector<1x32xf32>
    %222 = arith.negf %221 : vector<1x32xf32>
    %223 = math.exp %222 : vector<1x32xf32>
    %cst_70 = arith.constant 1.000000e+00 : f32
    %224 = vector.broadcast %cst_70 : f32 to vector<1x32xf32>
    %225 = arith.addf %224, %223 : vector<1x32xf32>
    %226 = arith.divf %224, %225 : vector<1x32xf32>
    %227 = vector.extract_strided_slice %15 {offsets = [7, 0], sizes = [1, 32], strides = [1, 1]} : vector<8x32xf32> to vector<1x32xf32>
    %228 = arith.addf %212, %19 : vector<1x32xf32>
    %229 = arith.mulf %219, %228 : vector<1x32xf32>
    %230 = arith.addf %227, %229 : vector<1x32xf32>
    %231 = math.tanh %230 : vector<1x32xf32>
    %cst_71 = arith.constant 1.000000e+00 : f32
    %232 = vector.broadcast %cst_71 : f32 to vector<1x32xf32>
    %233 = arith.subf %232, %226 : vector<1x32xf32>
    %234 = arith.mulf %233, %231 : vector<1x32xf32>
    %235 = arith.mulf %226, %209 : vector<1x32xf32>
    %236 = arith.addf %234, %235 : vector<1x32xf32>
    %c0_72 = arith.constant 0 : index
    %c0_73 = arith.constant 0 : index
    %237 = vector.load %arg11[%c0_72, %c0_73] : memref<32x8xf32, #tpu.memory_space<vmem>>, vector<32x8xf32>
    %cst_74 = arith.constant dense<0.000000e+00> : vector<1x8xf32>
    %238 = tpu.matmul %236, %237, %cst_74 {dimension_numbers = #tpu.dot_dimension_numbers<[1], [0], [0], [1], [0, 0, 1, 1], [], []>} : vector<1x32xf32>, vector<32x8xf32>, vector<1x8xf32> -> vector<1x8xf32>
    %c0_75 = arith.constant 0 : index
    %c0_76 = arith.constant 0 : index
    %239 = vector.load %arg12[%c0_75, %c0_76] : memref<1x8xf32, #tpu.memory_space<vmem>>, vector<1x8xf32>
    %240 = arith.addf %238, %239 : vector<1x8xf32>
    %c0_77 = arith.constant 0 : index
    %c0_78 = arith.constant 0 : index
    %241 = vector.load %arg13[%c0_77, %c0_78] : memref<1x8xf32, #tpu.memory_space<vmem>>, vector<1x8xf32>
    tpu.vector_store %arg13[%c0_77, %c0_78], %240 {strides = array<i32>} : memref<1x8xf32, #tpu.memory_space<vmem>>, vector<1x8xf32>,
    return
  }
}

</mosaic_0001>

<llo_original>
// kernel: tpu_custom_call.1
$region0: #{tpu_custom_call.1}
  #allocation0 [shape = 'u32[]', space=smem, size = 0x4, offset = 0x4, fixed_abs, tag = 'smem constant byte address 0x4 - core index']
  #allocation1 [shape = 'u32[144,128]{1,0:T(1,128)}', space=vmem, size = 0x12000, scoped, tag = 'internal scratch']
  %s0 = inlined_call_operand.hbm [shape: f32[8,16], index: 0, kind: input, shape index: {}]
  %s1 = inlined_call_operand.vmem [shape: f32[16,32], index: 1, kind: input, shape index: {}]
  %s2 = inlined_call_operand.hbm [shape: f32[16,32], index: 2, kind: input, shape index: {}]
  %s3 = inlined_call_operand.hbm [shape: f32[16,32], index: 3, kind: input, shape index: {}]
  %s4 = inlined_call_operand.vmem [shape: f32[32,32], index: 4, kind: input, shape index: {}]
  %s5 = inlined_call_operand.hbm [shape: f32[32,32], index: 5, kind: input, shape index: {}]
  %s6 = inlined_call_operand.hbm [shape: f32[32,32], index: 6, kind: input, shape index: {}]
  %s7 = inlined_call_operand.vmem [shape: f32[1,32], index: 7, kind: input, shape index: {}]
  %s8 = inlined_call_operand.vmem [shape: f32[1,32], index: 8, kind: input, shape index: {}]
  %s9 = inlined_call_operand.vmem [shape: f32[1,32], index: 9, kind: input, shape index: {}]
  %s10 = inlined_call_operand.vmem [shape: f32[1,32], index: 10, kind: input, shape index: {}]
  %s11 = inlined_call_operand.vmem [shape: f32[32,8], index: 11, kind: input, shape index: {}]
  %s12 = inlined_call_operand.vmem [shape: f32[1,8], index: 12, kind: input, shape index: {}]
  %s13 = inlined_call_operand.hbm [shape: f32[1,8], index: 13, kind: output, shape index: {}]
  %s14 = sld [smem:[#allocation0]]
  $region82: #{tpu_custom_call.1} parent=0
    _
  %s16 = ssub.s32 1, %s14
  %s17 = scalar_select 0, %s16, %s14
  $region1: #{tpu_custom_call.1} parent=0
    #allocation2 [shape = 'u8[4096]{0}', space=vmem, size = 0x1000, scoped, tag = 'input window, operand 0, single buffered']
    #allocation3 [shape = 's32[1]{0}', space=sflag, size = 0x4, scoped, tag = 'scoped memory for tpu_custom_call.1']
    #allocation4 [shape = 's32[1]{0}', space=sflag, size = 0x4, scoped, tag = 'scoped memory for tpu_custom_call.1']
    #allocation5 [shape = 'u8[8192]{0}', space=vmem, size = 0x2000, scoped, tag = 'input window, operand 2, single buffered']
    #allocation6 [shape = 's32[1]{0}', space=sflag, size = 0x4, scoped, tag = 'scoped memory for tpu_custom_call.1']
    #allocation7 [shape = 'u8[8192]{0}', space=vmem, size = 0x2000, scoped, tag = 'input window, operand 3, single buffered']
    #allocation8 [shape = 'u8[16384]{0}', space=vmem, size = 0x4000, scoped, tag = 'input window, operand 5, single buffered']
    #allocation9 [shape = 's32[1]{0}', space=sflag, size = 0x4, scoped, tag = 'scoped memory for tpu_custom_call.1']
    #allocation10 [shape = 'u8[16384]{0}', space=vmem, size = 0x4000, scoped, tag = 'input window, operand 6, single buffered']
    #allocation11 [shape = 'u8[512]{0}', space=vmem, size = 0x400, scoped, tag = 'output window, operand 0, single buffered']
    %18 = vsyncpa [#allocation3], 0
    %19 = vsyncpa [#allocation6], 0
    %20 = vsyncpa [#allocation9], 0
    %21 = vsyncpa [#allocation4], 0
    // Predicated region
    $region2: #{tpu_custom_call.1} parent=1 // pred_check
      _
    $region3: #{tpu_custom_call.1} parent=1 // pred_check_branch
      %23 = sbr.rel (0) target = $region5
    $region4: #{tpu_custom_call.1} parent=1 // pred_region
      %s25 = ssub.s32 128, 128
      %26 = vsyncadd [#allocation3], %s25
      %s28 = sshll.u32 [#allocation2], 4
      %s29 = int_to_ptr.vmem [resolvable:$true] %s28
      %31 = dma.hbm_to_vmem [thread:$0]  %s0, 128, %s29, [#allocation3]
    $region5: #{tpu_custom_call.1} parent=1 // pred_fallthru
      _
    // Predicated region
    $region6: #{tpu_custom_call.1} parent=1 // pred_check
      _
    $region7: #{tpu_custom_call.1} parent=1 // pred_check_branch
      %33 = sbr.rel (0) target = $region9
    $region8: #{tpu_custom_call.1} parent=1 // pred_region
      _
    $region9: #{tpu_custom_call.1} parent=1 // pred_fallthru
      _
    // Predicated region
    $region10: #{tpu_custom_call.1} parent=1 // pred_check
      _
    $region11: #{tpu_custom_call.1} parent=1 // pred_check_branch
      %35 = sbr.rel (0) target = $region13
    $region12: #{tpu_custom_call.1} parent=1 // pred_region
      %s37 = ssub.s32 256, 256
      %38 = vsyncadd [#allocation6], %s37
      %s39 = sshll.u32 [#allocation5], 4
      %s40 = int_to_ptr.vmem [resolvable:$true] %s39
      %45 = dma.hbm_to_vmem [thread:$0]  %s2, 256, %s40, [#allocation6], 128, 128, 8
    $region13: #{tpu_custom_call.1} parent=1 // pred_fallthru
      _
    // Predicated region
    $region14: #{tpu_custom_call.1} parent=1 // pred_check
      _
    $region15: #{tpu_custom_call.1} parent=1 // pred_check_branch
      %47 = sbr.rel (0) target = $region17
    $region16: #{tpu_custom_call.1} parent=1 // pred_region
      %s49 = ssub.s32 256, 256
      %50 = vsyncadd [#allocation6], %s49
      %s51 = sshll.u32 [#allocation7], 4
      %s52 = int_to_ptr.vmem [resolvable:$true] %s51
      %57 = dma.hbm_to_vmem [thread:$0]  %s3, 256, %s52, [#allocation6], 128, 128, 8
    $region17: #{tpu_custom_call.1} parent=1 // pred_fallthru
      _
    // Predicated region
    $region18: #{tpu_custom_call.1} parent=1 // pred_check
      _
    $region19: #{tpu_custom_call.1} parent=1 // pred_check_branch
      %59 = sbr.rel (0) target = $region21
    $region20: #{tpu_custom_call.1} parent=1 // pred_region
      _
    $region21: #{tpu_custom_call.1} parent=1 // pred_fallthru
      _
    // Predicated region
    $region22: #{tpu_custom_call.1} parent=1 // pred_check
      _
    $region23: #{tpu_custom_call.1} parent=1 // pred_check_branch
      %61 = sbr.rel (0) target = $region25
    $region24: #{tpu_custom_call.1} parent=1 // pred_region
      %s63 = ssub.s32 512, 512
      %64 = vsyncadd [#allocation9], %s63
      %s65 = sshll.u32 [#allocation8], 4
      %s66 = int_to_ptr.vmem [resolvable:$true] %s65
      %71 = dma.hbm_to_vmem [thread:$0]  %s5, 512, %s66, [#allocation9], 128, 128, 8
    $region25: #{tpu_custom_call.1} parent=1 // pred_fallthru
      _
    // Predicated region
    $region26: #{tpu_custom_call.1} parent=1 // pred_check
      _
    $region27: #{tpu_custom_call.1} parent=1 // pred_check_branch
      %73 = sbr.rel (0) target = $region29
    $region28: #{tpu_custom_call.1} parent=1 // pred_region
      %s75 = ssub.s32 512, 512
      %76 = vsyncadd [#allocation9], %s75
      %s77 = sshll.u32 [#allocation10], 4
      %s78 = int_to_ptr.vmem [resolvable:$true] %s77
      %83 = dma.hbm_to_vmem [thread:$0]  %s6, 512, %s78, [#allocation9], 128, 128, 8
    $region29: #{tpu_custom_call.1} parent=1 // pred_fallthru
      _
    // Predicated region
    $region30: #{tpu_custom_call.1} parent=1 // pred_check
      _
    $region31: #{tpu_custom_call.1} parent=1 // pred_check_branch
      %85 = sbr.rel (0) target = $region33
    $region32: #{tpu_custom_call.1} parent=1 // pred_region
      _
    $region33: #{tpu_custom_call.1} parent=1 // pred_fallthru
      _
    // Predicated region
    $region34: #{tpu_custom_call.1} parent=1 // pred_check
      _
    $region35: #{tpu_custom_call.1} parent=1 // pred_check_branch
      %87 = sbr.rel (0) target = $region37
    $region36: #{tpu_custom_call.1} parent=1 // pred_region
      _
    $region37: #{tpu_custom_call.1} parent=1 // pred_fallthru
      _
    // Predicated region
    $region38: #{tpu_custom_call.1} parent=1 // pred_check
      _
    $region39: #{tpu_custom_call.1} parent=1 // pred_check_branch
      %89 = sbr.rel (0) target = $region41
    $region40: #{tpu_custom_call.1} parent=1 // pred_region
      _
    $region41: #{tpu_custom_call.1} parent=1 // pred_fallthru
      _
    // Predicated region
    $region42: #{tpu_custom_call.1} parent=1 // pred_check
      _
    $region43: #{tpu_custom_call.1} parent=1 // pred_check_branch
      %91 = sbr.rel (0) target = $region45
    $region44: #{tpu_custom_call.1} parent=1 // pred_region
      _
    $region45: #{tpu_custom_call.1} parent=1 // pred_fallthru
      _
    // Predicated region
    $region46: #{tpu_custom_call.1} parent=1 // pred_check
      _
    $region47: #{tpu_custom_call.1} parent=1 // pred_check_branch
      %93 = sbr.rel (0) target = $region49
    $region48: #{tpu_custom_call.1} parent=1 // pred_region
      _
    $region49: #{tpu_custom_call.1} parent=1 // pred_fallthru
      _
    // Predicated region
    $region50: #{tpu_custom_call.1} parent=1 // pred_check
      _
    $region51: #{tpu_custom_call.1} parent=1 // pred_check_branch
      %95 = sbr.rel (0) target = $region53
    $region52: #{tpu_custom_call.1} parent=1 // pred_region
      _
    $region53: #{tpu_custom_call.1} parent=1 // pred_fallthru
      _
    // Predicated region
    $region54: #{tpu_custom_call.1} parent=1 // pred_check
      _
    $region55: #{tpu_custom_call.1} parent=1 // pred_check_branch
      %97 = sbr.rel (0) target = $region57
    $region56: #{tpu_custom_call.1} parent=1 // pred_region
      %98 = dma.done [#allocation3], 128
    $region57: #{tpu_custom_call.1} parent=1 // pred_fallthru
      _
    // Predicated region
    $region58: #{tpu_custom_call.1} parent=1 // pred_check
      _
    $region59: #{tpu_custom_call.1} parent=1 // pred_check_branch
      %100 = sbr.rel (0) target = $region61
    $region60: #{tpu_custom_call.1} parent=1 // pred_region
      %101 = dma.done [#allocation6], 256
    $region61: #{tpu_custom_call.1} parent=1 // pred_fallthru
      _
    // Predicated region
    $region62: #{tpu_custom_call.1} parent=1 // pred_check
      _
    $region63: #{tpu_custom_call.1} parent=1 // pred_check_branch
      %103 = sbr.rel (0) target = $region65
    $region64: #{tpu_custom_call.1} parent=1 // pred_region
      %104 = dma.done [#allocation6], 256
    $region65: #{tpu_custom_call.1} parent=1 // pred_fallthru
      _
    // Predicated region
    $region66: #{tpu_custom_call.1} parent=1 // pred_check
      _
    $region67: #{tpu_custom_call.1} parent=1 // pred_check_branch
      %106 = sbr.rel (0) target = $region69
    $region68: #{tpu_custom_call.1} parent=1 // pred_region
      %107 = dma.done [#allocation9], 512
    $region69: #{tpu_custom_call.1} parent=1 // pred_fallthru
      _
    // Predicated region
    $region70: #{tpu_custom_call.1} parent=1 // pred_check
      _
    $region71: #{tpu_custom_call.1} parent=1 // pred_check_branch
      %109 = sbr.rel (0) target = $region73
    $region72: #{tpu_custom_call.1} parent=1 // pred_region
      %110 = dma.done [#allocation9], 512
    $region73: #{tpu_custom_call.1} parent=1 // pred_fallthru
      _
    %v111 = vld [vmem:[#allocation2] sm:$0xff]
    %v112 = vld [vmem:[%s1] sm:$0xff]
    %v113 = vld [vmem:[%s1 + $0x8] sm:$0xff]
    %v114 = vld [vmem:[%s7] sm:$0x1]
    %v116 = vlaneseq
    %v117 = vshrl.u32 %v116, 7
    %v118 = vsub.s32 0, %v117
    %v119 = vrot.slane %v114, %v118
    %vm121 = vcmask 130048
    %v123 = vsel %vm121, %v111, 0
    %125 = vmatprep.subr.mxu0 0.0
    %126 = vmatpush1.msra.mxu0 %v112
    %127 = vmatprep.subr.mxu0 0.0
    %128 = vmatpush1.msra.mxu0 %v113
    %129 = vmatprep.subr.mxu0 0.0
    %130 = vmatpush1.msra.mxu0 0.0
    %131 = vmatprep.subr.mxu0 0.0
    %132 = vmatpush1.msra.mxu0 0.0
    %133 = vmatprep.subr.mxu0 0.0
    %134 = vmatpush1.msra.mxu0 0.0
    %135 = vmatprep.subr.mxu0 0.0
    %136 = vmatpush1.msra.mxu0 0.0
    %137 = vmatprep.subr.mxu0 0.0
    %138 = vmatpush1.msra.mxu0 0.0
    %139 = vmatprep.subr.mxu0 0.0
    %140 = vmatpush1.msra.mxu0 0.0
    %141 = vmatprep.subr.mxu0 0.0
    %142 = vmatpush1.msra.mxu0 0.0
    %143 = vmatprep.subr.mxu0 0.0
    %144 = vmatpush1.msra.mxu0 0.0
    %145 = vmatprep.subr.mxu0 0.0
    %146 = vmatpush1.msra.mxu0 0.0
    %147 = vmatprep.subr.mxu0 0.0
    %148 = vmatpush1.msra.mxu0 0.0
    %149 = vmatprep.subr.mxu0 0.0
    %150 = vmatpush1.msra.mxu0 0.0
    %151 = vmatprep.subr.mxu0 0.0
    %152 = vmatpush1.msra.mxu0 0.0
    %153 = vmatprep.subr.mxu0 0.0
    %154 = vmatpush1.msra.mxu0 0.0
    %155 = vmatprep.subr.mxu0 0.0
    %156 = vmatpush1.msra.mxu0 0.0
    %157 = vmatprep.subr.mxu0 0.0
    %158 = vmatpush1.msra.mxu0 0.0
    %159 = vmatprep.subr.mxu0 0.0
    %160 = vmatpush1.msra.mxu0 0.0
    %161 = vmatprep.subr.mxu0 0.0
    %162 = vmatpush1.msra.mxu0 0.0
    %163 = vmatprep.subr.mxu0 0.0
    %164 = vmatpush1.msra.mxu0 0.0
    %165 = vmatprep.subr.mxu0 0.0
    %166 = vmatpush1.msra.mxu0 0.0
    %167 = vmatprep.subr.mxu0 0.0
    %168 = vmatpush1.msra.mxu0 0.0
    %169 = vmatprep.subr.mxu0 0.0
    %170 = vmatpush1.msra.mxu0 0.0
    %171 = vmatprep.subr.mxu0 0.0
    %172 = vmatpush1.msra.mxu0 0.0
    %173 = vmatprep.subr.mxu0 0.0
    %174 = vmatpush1.msra.mxu0 0.0
    %175 = vmatprep.subr.mxu0 0.0
    %176 = vmatpush1.msra.mxu0 0.0
    %177 = vmatprep.subr.mxu0 0.0
    %178 = vmatpush1.msra.mxu0 0.0
    %179 = vmatprep.subr.mxu0 0.0
    %180 = vmatpush1.msra.mxu0 0.0
    %181 = vmatprep.subr.mxu0 0.0
    %182 = vmatpush1.msra.mxu0 0.0
    %183 = vmatprep.subr.mxu0 0.0
    %184 = vmatpush1.msra.mxu0 0.0
    %185 = vmatprep.subr.mxu0 0.0
    %186 = vmatpush1.msra.mxu0 0.0
    %187 = vmatprep.subr.mxu0 0.0
    %188 = vmatpush1.msra.mxu0 0.0
    %189 = vmatprep.mubr.f32.mxu0 0.0
    %190 = vmatmul.mubr.f32.gmra.mrb[0].mxu0 %v123
    %v191 = vpop.f32.mrb[0].mxu0
    %v192 = vadd.f32 %v119, %v191
    %v193 = vpop.f32.mrb[0].mxu0
    %194 = vdwg.mxu0
    %v195 = vld [vmem:[#allocation5] sm:$0xff]
    %v196 = vld [vmem:[#allocation5 + $0x8] sm:$0xff]
    %v197 = vld [vmem:[%s8] sm:$0x1]
    %v199 = vlaneseq
    %v200 = vshrl.u32 %v199, 7
    %v201 = vsub.s32 0, %v200
    %v202 = vrot.slane %v197, %v201
    %204 = vmatprep.subr.mxu0 0.0
    %205 = vmatpush1.msra.mxu0 %v195
    %206 = vmatprep.subr.mxu0 0.0
    %207 = vmatpush1.msra.mxu0 %v196
    %208 = vmatprep.subr.mxu0 0.0
    %209 = vmatpush1.msra.mxu0 0.0
    %210 = vmatprep.subr.mxu0 0.0
    %211 = vmatpush1.msra.mxu0 0.0
    %212 = vmatprep.subr.mxu0 0.0
    %213 = vmatpush1.msra.mxu0 0.0
    %214 = vmatprep.subr.mxu0 0.0
    %215 = vmatpush1.msra.mxu0 0.0
    %216 = vmatprep.subr.mxu0 0.0
    %217 = vmatpush1.msra.mxu0 0.0
    %218 = vmatprep.subr.mxu0 0.0
    %219 = vmatpush1.msra.mxu0 0.0
    %220 = vmatprep.subr.mxu0 0.0
    %221 = vmatpush1.msra.mxu0 0.0
    %222 = vmatprep.subr.mxu0 0.0
    %223 = vmatpush1.msra.mxu0 0.0
    %224 = vmatprep.subr.mxu0 0.0
    %225 = vmatpush1.msra.mxu0 0.0
    %226 = vmatprep.subr.mxu0 0.0
    %227 = vmatpush1.msra.mxu0 0.0
    %228 = vmatprep.subr.mxu0 0.0
    %229 = vmatpush1.msra.mxu0 0.0
    %230 = vmatprep.subr.mxu0 0.0
    %231 = vmatpush1.msra.mxu0 0.0
    %232 = vmatprep.subr.mxu0 0.0
    %233 = vmatpush1.msra.mxu0 0.0
    %234 = vmatprep.subr.mxu0 0.0
    %235 = vmatpush1.msra.mxu0 0.0
    %236 = vmatprep.subr.mxu0 0.0
    %237 = vmatpush1.msra.mxu0 0.0
    %238 = vmatprep.subr.mxu0 0.0
    %239 = vmatpush1.msra.mxu0 0.0
    %240 = vmatprep.subr.mxu0 0.0
    %241 = vmatpush1.msra.mxu0 0.0
    %242 = vmatprep.subr.mxu0 0.0
    %243 = vmatpush1.msra.mxu0 0.0
    %244 = vmatprep.subr.mxu0 0.0
    %245 = vmatpush1.msra.mxu0 0.0
    %246 = vmatprep.subr.mxu0 0.0
    %247 = vmatpush1.msra.mxu0 0.0
    %248 = vmatprep.subr.mxu0 0.0
    %249 = vmatpush1.msra.mxu0 0.0
    %250 = vmatprep.subr.mxu0 0.0
    %251 = vmatpush1.msra.mxu0 0.0
    %252 = vmatprep.subr.mxu0 0.0
    %253 = vmatpush1.msra.mxu0 0.0
    %254 = vmatprep.subr.mxu0 0.0
    %255 = vmatpush1.msra.mxu0 0.0
    %256 = vmatprep.subr.mxu0 0.0
    %257 = vmatpush1.msra.mxu0 0.0
    %258 = vmatprep.subr.mxu0 0.0
    %259 = vmatpush1.msra.mxu0 0.0
    %260 = vmatprep.subr.mxu0 0.0
    %261 = vmatpush1.msra.mxu0 0.0
    %262 = vmatprep.subr.mxu0 0.0
    %263 = vmatpush1.msra.mxu0 0.0
    %264 = vmatprep.subr.mxu0 0.0
    %265 = vmatpush1.msra.mxu0 0.0
    %266 = vmatprep.subr.mxu0 0.0
    %267 = vmatpush1.msra.mxu0 0.0
    %268 = vmatprep.mubr.f32.mxu0 0.0
    %269 = vmatmul.mubr.f32.gmra.mrb[0].mxu0 %v123
    %v270 = vpop.f32.mrb[0].mxu0
    %v271 = vadd.f32 %v202, %v270
    %v272 = vpop.f32.mrb[0].mxu0
    %273 = vdwg.mxu0
    %v274 = vld [vmem:[#allocation7] sm:$0xff]
    %v275 = vld [vmem:[#allocation7 + $0x8] sm:$0xff]
    %v276 = vld [vmem:[%s9] sm:$0x1]
    %v278 = vlaneseq
    %v279 = vshrl.u32 %v278, 7
    %v280 = vsub.s32 0, %v279
    %v281 = vrot.slane %v276, %v280
    %283 = vmatprep.subr.mxu0 0.0
    %284 = vmatpush1.msra.mxu0 %v274
    %285 = vmatprep.subr.mxu0 0.0
    %286 = vmatpush1.msra.mxu0 %v275
    %287 = vmatprep.subr.mxu0 0.0
    %288 = vmatpush1.msra.mxu0 0.0
    %289 = vmatprep.subr.mxu0 0.0
    %290 = vmatpush1.msra.mxu0 0.0
    %291 = vmatprep.subr.mxu0 0.0
    %292 = vmatpush1.msra.mxu0 0.0
    %293 = vmatprep.subr.mxu0 0.0
    %294 = vmatpush1.msra.mxu0 0.0
    %295 = vmatprep.subr.mxu0 0.0
    %296 = vmatpush1.msra.mxu0 0.0
    %297 = vmatprep.subr.mxu0 0.0
    %298 = vmatpush1.msra.mxu0 0.0
    %299 = vmatprep.subr.mxu0 0.0
    %300 = vmatpush1.msra.mxu0 0.0
    %301 = vmatprep.subr.mxu0 0.0
    %302 = vmatpush1.msra.mxu0 0.0
    %303 = vmatprep.subr.mxu0 0.0
    %304 = vmatpush1.msra.mxu0 0.0
    %305 = vmatprep.subr.mxu0 0.0
    %306 = vmatpush1.msra.mxu0 0.0
    %307 = vmatprep.subr.mxu0 0.0
    %308 = vmatpush1.msra.mxu0 0.0
    %309 = vmatprep.subr.mxu0 0.0
    %310 = vmatpush1.msra.mxu0 0.0
    %311 = vmatprep.subr.mxu0 0.0
    %312 = vmatpush1.msra.mxu0 0.0
    %313 = vmatprep.subr.mxu0 0.0
    %314 = vmatpush1.msra.mxu0 0.0
    %315 = vmatprep.subr.mxu0 0.0
    %316 = vmatpush1.msra.mxu0 0.0
    %317 = vmatprep.subr.mxu0 0.0
    %318 = vmatpush1.msra.mxu0 0.0
    %319 = vmatprep.subr.mxu0 0.0
    %320 = vmatpush1.msra.mxu0 0.0
    %321 = vmatprep.subr.mxu0 0.0
    %322 = vmatpush1.msra.mxu0 0.0
    %323 = vmatprep.subr.mxu0 0.0
    %324 = vmatpush1.msra.mxu0 0.0
    %325 = vmatprep.subr.mxu0 0.0
    %326 = vmatpush1.msra.mxu0 0.0
    %327 = vmatprep.subr.mxu0 0.0
    %328 = vmatpush1.msra.mxu0 0.0
    %329 = vmatprep.subr.mxu0 0.0
    %330 = vmatpush1.msra.mxu0 0.0
    %331 = vmatprep.subr.mxu0 0.0
    %332 = vmatpush1.msra.mxu0 0.0
    %333 = vmatprep.subr.mxu0 0.0
    %334 = vmatpush1.msra.mxu0 0.0
    %335 = vmatprep.subr.mxu0 0.0
    %336 = vmatpush1.msra.mxu0 0.0
    %337 = vmatprep.subr.mxu0 0.0
    %338 = vmatpush1.msra.mxu0 0.0
    %339 = vmatprep.subr.mxu0 0.0
    %340 = vmatpush1.msra.mxu0 0.0
    %341 = vmatprep.subr.mxu0 0.0
    %342 = vmatpush1.msra.mxu0 0.0
    %343 = vmatprep.subr.mxu0 0.0
    %344 = vmatpush1.msra.mxu0 0.0
    %345 = vmatprep.subr.mxu0 0.0
    %346 = vmatpush1.msra.mxu0 0.0
    %347 = vmatprep.mubr.f32.mxu0 0.0
    %348 = vmatmul.mubr.f32.gmra.mrb[0].mxu0 %v123
    %v349 = vpop.f32.mrb[0].mxu0
    %v350 = vadd.f32 %v281, %v349
    %v351 = vpop.f32.mrb[0].mxu0
    %352 = vdwg.mxu0
    %v353 = vld [vmem:[%s4] sm:$0xff]
    %v354 = vld [vmem:[%s4 + $0x8] sm:$0xff]
    %v355 = vld [vmem:[%s4 + $0x10] sm:$0xff]
    %v356 = vld [vmem:[%s4 + $0x18] sm:$0xff]
    %v357 = vld [vmem:[#allocation8] sm:$0xff]
    %v358 = vld [vmem:[#allocation8 + $0x8] sm:$0xff]
    %v359 = vld [vmem:[#allocation8 + $0x10] sm:$0xff]
    %v360 = vld [vmem:[#allocation8 + $0x18] sm:$0xff]
    %v361 = vld [vmem:[#allocation10] sm:$0xff]
    %v362 = vld [vmem:[#allocation10 + $0x8] sm:$0xff]
    %v363 = vld [vmem:[#allocation10 + $0x10] sm:$0xff]
    %v364 = vld [vmem:[#allocation10 + $0x18] sm:$0xff]
    %v365 = vld [vmem:[%s10] sm:$0x1]
    %vm366 = vcmask 261120
    %v368 = vsel %vm366, 0.0, 0
    %370 = vmatprep.subr.mxu0 0.0
    %371 = vmatpush1.msra.mxu0 %v353
    %372 = vmatprep.subr.mxu0 0.0
    %373 = vmatpush1.msra.mxu0 %v354
    %374 = vmatprep.subr.mxu0 0.0
    %375 = vmatpush1.msra.mxu0 %v355
    %376 = vmatprep.subr.mxu0 0.0
    %377 = vmatpush1.msra.mxu0 %v356
    %378 = vmatprep.subr.mxu0 0.0
    %379 = vmatpush1.msra.mxu0 0.0
    %380 = vmatprep.subr.mxu0 0.0
    %381 = vmatpush1.msra.mxu0 0.0
    %382 = vmatprep.subr.mxu0 0.0
    %383 = vmatpush1.msra.mxu0 0.0
    %384 = vmatprep.subr.mxu0 0.0
    %385 = vmatpush1.msra.mxu0 0.0
    %386 = vmatprep.subr.mxu0 0.0
    %387 = vmatpush1.msra.mxu0 0.0
    %388 = vmatprep.subr.mxu0 0.0
    %389 = vmatpush1.msra.mxu0 0.0
    %390 = vmatprep.subr.mxu0 0.0
    %391 = vmatpush1.msra.mxu0 0.0
    %392 = vmatprep.subr.mxu0 0.0
    %393 = vmatpush1.msra.mxu0 0.0
    %394 = vmatprep.subr.mxu0 0.0
    %395 = vmatpush1.msra.mxu0 0.0
    %396 = vmatprep.subr.mxu0 0.0
    %397 = vmatpush1.msra.mxu0 0.0
    %398 = vmatprep.subr.mxu0 0.0
    %399 = vmatpush1.msra.mxu0 0.0
    %400 = vmatprep.subr.mxu0 0.0
    %401 = vmatpush1.msra.mxu0 0.0
    %402 = vmatprep.subr.mxu0 0.0
    %403 = vmatpush1.msra.mxu0 0.0
    %404 = vmatprep.subr.mxu0 0.0
    %405 = vmatpush1.msra.mxu0 0.0
    %406 = vmatprep.subr.mxu0 0.0
    %407 = vmatpush1.msra.mxu0 0.0
    %408 = vmatprep.subr.mxu0 0.0
    %409 = vmatpush1.msra.mxu0 0.0
    %410 = vmatprep.subr.mxu0 0.0
    %411 = vmatpush1.msra.mxu0 0.0
    %412 = vmatprep.subr.mxu0 0.0
    %413 = vmatpush1.msra.mxu0 0.0
    %414 = vmatprep.subr.mxu0 0.0
    %415 = vmatpush1.msra.mxu0 0.0
    %416 = vmatprep.subr.mxu0 0.0
    %417 = vmatpush1.msra.mxu0 0.0
    %418 = vmatprep.subr.mxu0 0.0
    %419 = vmatpush1.msra.mxu0 0.0
    %420 = vmatprep.subr.mxu0 0.0
    %421 = vmatpush1.msra.mxu0 0.0
    %422 = vmatprep.subr.mxu0 0.0
    %423 = vmatpush1.msra.mxu0 0.0
    %424 = vmatprep.subr.mxu0 0.0
    %425 = vmatpush1.msra.mxu0 0.0
    %426 = vmatprep.subr.mxu0 0.0
    %427 = vmatpush1.msra.mxu0 0.0
    %428 = vmatprep.subr.mxu0 0.0
    %429 = vmatpush1.msra.mxu0 0.0
    %430 = vmatprep.subr.mxu0 0.0
    %431 = vmatpush1.msra.mxu0 0.0
    %432 = vmatprep.subr.mxu0 0.0
    %433 = vmatpush1.msra.mxu0 0.0
    %434 = vmatprep.mubr.f32.mxu0 0.0
    %435 = vmatmul.mubr.f32.gmra.mrb[0].mxu0 %v368
    %v436 = vpop.f32.mrb[0].mxu0
    %v437 = vadd.f32 0.0, %v436
    %v438 = vpop.f32.mrb[0].mxu0
    %439 = vdwg.mxu0
    %440 = vmatprep.subr.mxu0 0.0
    %441 = vmatpush1.msra.mxu0 %v357
    %442 = vmatprep.subr.mxu0 0.0
    %443 = vmatpush1.msra.mxu0 %v358
    %444 = vmatprep.subr.mxu0 0.0
    %445 = vmatpush1.msra.mxu0 %v359
    %446 = vmatprep.subr.mxu0 0.0
    %447 = vmatpush1.msra.mxu0 %v360
    %448 = vmatprep.subr.mxu0 0.0
    %449 = vmatpush1.msra.mxu0 0.0
    %450 = vmatprep.subr.mxu0 0.0
    %451 = vmatpush1.msra.mxu0 0.0
    %452 = vmatprep.subr.mxu0 0.0
    %453 = vmatpush1.msra.mxu0 0.0
    %454 = vmatprep.subr.mxu0 0.0
    %455 = vmatpush1.msra.mxu0 0.0
    %456 = vmatprep.subr.mxu0 0.0
    %457 = vmatpush1.msra.mxu0 0.0
    %458 = vmatprep.subr.mxu0 0.0
    %459 = vmatpush1.msra.mxu0 0.0
    %460 = vmatprep.subr.mxu0 0.0
    %461 = vmatpush1.msra.mxu0 0.0
    %462 = vmatprep.subr.mxu0 0.0
    %463 = vmatpush1.msra.mxu0 0.0
    %464 = vmatprep.subr.mxu0 0.0
    %465 = vmatpush1.msra.mxu0 0.0
    %466 = vmatprep.subr.mxu0 0.0
    %467 = vmatpush1.msra.mxu0 0.0
    %468 = vmatprep.subr.mxu0 0.0
    %469 = vmatpush1.msra.mxu0 0.0
    %470 = vmatprep.subr.mxu0 0.0
    %471 = vmatpush1.msra.mxu0 0.0
    %472 = vmatprep.subr.mxu0 0.0
    %473 = vmatpush1.msra.mxu0 0.0
    %474 = vmatprep.subr.mxu0 0.0
    %475 = vmatpush1.msra.mxu0 0.0
    %476 = vmatprep.subr.mxu0 0.0
    %477 = vmatpush1.msra.mxu0 0.0
    %478 = vmatprep.subr.mxu0 0.0
    %479 = vmatpush1.msra.mxu0 0.0
    %480 = vmatprep.subr.mxu0 0.0
    %481 = vmatpush1.msra.mxu0 0.0
    %482 = vmatprep.subr.mxu0 0.0
    %483 = vmatpush1.msra.mxu0 0.0
    %484 = vmatprep.subr.mxu0 0.0
    %485 = vmatpush1.msra.mxu0 0.0
    %486 = vmatprep.subr.mxu0 0.0
    %487 = vmatpush1.msra.mxu0 0.0
    %488 = vmatprep.subr.mxu0 0.0
    %489 = vmatpush1.msra.mxu0 0.0
    %490 = vmatprep.subr.mxu0 0.0
    %491 = vmatpush1.msra.mxu0 0.0
    %492 = vmatprep.subr.mxu0 0.0
    %493 = vmatpush1.msra.mxu0 0.0
    %494 = vmatprep.subr.mxu0 0.0
    %495 = vmatpush1.msra.mxu0 0.0
    %496 = vmatprep.subr.mxu0 0.0
    %497 = vmatpush1.msra.mxu0 0.0
    %498 = vmatprep.subr.mxu0 0.0
    %499 = vmatpush1.msra.mxu0 0.0
    %500 = vmatprep.subr.mxu0 0.0
    %501 = vmatpush1.msra.mxu0 0.0
    %502 = vmatprep.subr.mxu0 0.0
    %503 = vmatpush1.msra.mxu0 0.0
    %504 = vmatprep.mubr.f32.mxu0 0.0
    %505 = vmatmul.mubr.f32.gmra.mrb[0].mxu0 %v368
    %v506 = vpop.f32.mrb[0].mxu0
    %v507 = vadd.f32 0.0, %v506
    %v508 = vpop.f32.mrb[0].mxu0
    %509 = vdwg.mxu0
    %v510 = vadd.f32 %v192, %v437
    %v511 = vxor.u32 %v510, 2147483648
    %v512 = vmul.f32 %v511, 1.442695
    %v513 = vpow.pop %v512
    %v514 = vadd.f32 %v513, 1.0
    %v515 = vrcp.pop %v514
    %v516 = vmul.f32 1.0, %v515
    %v517 = vadd.f32 %v271, %v507
    %v518 = vxor.u32 %v517, 2147483648
    %v519 = vmul.f32 %v518, 1.442695
    %v520 = vpow.pop %v519
    %v521 = vadd.f32 %v520, 1.0
    %v522 = vrcp.pop %v521
    %v523 = vmul.f32 1.0, %v522
    %524 = vmatprep.subr.mxu0 0.0
    %525 = vmatpush1.msra.mxu0 %v361
    %526 = vmatprep.subr.mxu0 0.0
    %527 = vmatpush1.msra.mxu0 %v362
    %528 = vmatprep.subr.mxu0 0.0
    %529 = vmatpush1.msra.mxu0 %v363
    %530 = vmatprep.subr.mxu0 0.0
    %531 = vmatpush1.msra.mxu0 %v364
    %532 = vmatprep.subr.mxu0 0.0
    %533 = vmatpush1.msra.mxu0 0.0
    %534 = vmatprep.subr.mxu0 0.0
    %535 = vmatpush1.msra.mxu0 0.0
    %536 = vmatprep.subr.mxu0 0.0
    %537 = vmatpush1.msra.mxu0 0.0
    %538 = vmatprep.subr.mxu0 0.0
    %539 = vmatpush1.msra.mxu0 0.0
    %540 = vmatprep.subr.mxu0 0.0
    %541 = vmatpush1.msra.mxu0 0.0
    %542 = vmatprep.subr.mxu0 0.0
    %543 = vmatpush1.msra.mxu0 0.0
    %544 = vmatprep.subr.mxu0 0.0
    %545 = vmatpush1.msra.mxu0 0.0
    %546 = vmatprep.subr.mxu0 0.0
    %547 = vmatpush1.msra.mxu0 0.0
    %548 = vmatprep.subr.mxu0 0.0
    %549 = vmatpush1.msra.mxu0 0.0
    %550 = vmatprep.subr.mxu0 0.0
    %551 = vmatpush1.msra.mxu0 0.0
    %552 = vmatprep.subr.mxu0 0.0
    %553 = vmatpush1.msra.mxu0 0.0
    %554 = vmatprep.subr.mxu0 0.0
    %555 = vmatpush1.msra.mxu0 0.0
    %556 = vmatprep.subr.mxu0 0.0
    %557 = vmatpush1.msra.mxu0 0.0
    %558 = vmatprep.subr.mxu0 0.0
    %559 = vmatpush1.msra.mxu0 0.0
    %560 = vmatprep.subr.mxu0 0.0
    %561 = vmatpush1.msra.mxu0 0.0
    %562 = vmatprep.subr.mxu0 0.0
    %563 = vmatpush1.msra.mxu0 0.0
    %564 = vmatprep.subr.mxu0 0.0
    %565 = vmatpush1.msra.mxu0 0.0
    %566 = vmatprep.subr.mxu0 0.0
    %567 = vmatpush1.msra.mxu0 0.0
    %568 = vmatprep.subr.mxu0 0.0
    %569 = vmatpush1.msra.mxu0 0.0
    %570 = vmatprep.subr.mxu0 0.0
    %571 = vmatpush1.msra.mxu0 0.0
    %572 = vmatprep.subr.mxu0 0.0
    %573 = vmatpush1.msra.mxu0 0.0
    %574 = vmatprep.subr.mxu0 0.0
    %575 = vmatpush1.msra.mxu0 0.0
    %576 = vmatprep.subr.mxu0 0.0
    %577 = vmatpush1.msra.mxu0 0.0
    %578 = vmatprep.subr.mxu0 0.0
    %579 = vmatpush1.msra.mxu0 0.0
    %580 = vmatprep.subr.mxu0 0.0
    %581 = vmatpush1.msra.mxu0 0.0
    %582 = vmatprep.subr.mxu0 0.0
    %583 = vmatpush1.msra.mxu0 0.0
    %584 = vmatprep.subr.mxu0 0.0
    %585 = vmatpush1.msra.mxu0 0.0
    %586 = vmatprep.subr.mxu0 0.0
    %587 = vmatpush1.msra.mxu0 0.0
    %588 = vmatprep.mubr.f32.mxu0 0.0
    %589 = vmatmul.mubr.f32.gmra.mrb[0].mxu0 %v368
    %v590 = vpop.f32.mrb[0].mxu0
    %v591 = vadd.f32 %v365, %v590
    %v592 = vpop.f32.mrb[0].mxu0
    %593 = vdwg.mxu0
    %v594 = vmul.f32 %v516, %v591
    %v595 = vadd.f32 %v350, %v594
    %v596 = vtanh.pop %v595
    %v597 = vsub.f32 1.0, %v523
    %v598 = vmul.f32 %v597, %v596
    %v599 = vmul.f32 %v523, 0.0
    %v600 = vadd.f32 %v598, %v599
    %v602 = vsel %vm366, %v600, 0
    %604 = vmatprep.subr.mxu0 0.0
    %605 = vmatpush1.msra.mxu0 %v353
    %606 = vmatprep.subr.mxu0 0.0
    %607 = vmatpush1.msra.mxu0 %v354
    %608 = vmatprep.subr.mxu0 0.0
    %609 = vmatpush1.msra.mxu0 %v355
    %610 = vmatprep.subr.mxu0 0.0
    %611 = vmatpush1.msra.mxu0 %v356
    %612 = vmatprep.subr.mxu0 0.0
    %613 = vmatpush1.msra.mxu0 0.0
    %614 = vmatprep.subr.mxu0 0.0
    %615 = vmatpush1.msra.mxu0 0.0
    %616 = vmatprep.subr.mxu0 0.0
    %617 = vmatpush1.msra.mxu0 0.0
    %618 = vmatprep.subr.mxu0 0.0
    %619 = vmatpush1.msra.mxu0 0.0
    %620 = vmatprep.subr.mxu0 0.0
    %621 = vmatpush1.msra.mxu0 0.0
    %622 = vmatprep.subr.mxu0 0.0
    %623 = vmatpush1.msra.mxu0 0.0
    %624 = vmatprep.subr.mxu0 0.0
    %625 = vmatpush1.msra.mxu0 0.0
    %626 = vmatprep.subr.mxu0 0.0
    %627 = vmatpush1.msra.mxu0 0.0
    %628 = vmatprep.subr.mxu0 0.0
    %629 = vmatpush1.msra.mxu0 0.0
    %630 = vmatprep.subr.mxu0 0.0
    %631 = vmatpush1.msra.mxu0 0.0
    %632 = vmatprep.subr.mxu0 0.0
    %633 = vmatpush1.msra.mxu0 0.0
    %634 = vmatprep.subr.mxu0 0.0
    %635 = vmatpush1.msra.mxu0 0.0
    %636 = vmatprep.subr.mxu0 0.0
    %637 = vmatpush1.msra.mxu0 0.0
    %638 = vmatprep.subr.mxu0 0.0
    %639 = vmatpush1.msra.mxu0 0.0
    %640 = vmatprep.subr.mxu0 0.0
    %641 = vmatpush1.msra.mxu0 0.0
    %642 = vmatprep.subr.mxu0 0.0
    %643 = vmatpush1.msra.mxu0 0.0
    %644 = vmatprep.subr.mxu0 0.0
    %645 = vmatpush1.msra.mxu0 0.0
    %646 = vmatprep.subr.mxu0 0.0
    %647 = vmatpush1.msra.mxu0 0.0
    %648 = vmatprep.subr.mxu0 0.0
    %649 = vmatpush1.msra.mxu0 0.0
    %650 = vmatprep.subr.mxu0 0.0
    %651 = vmatpush1.msra.mxu0 0.0
    %652 = vmatprep.subr.mxu0 0.0
    %653 = vmatpush1.msra.mxu0 0.0
    %654 = vmatprep.subr.mxu0 0.0
    %655 = vmatpush1.msra.mxu0 0.0
    %656 = vmatprep.subr.mxu0 0.0
    %657 = vmatpush1.msra.mxu0 0.0
    %658 = vmatprep.subr.mxu0 0.0
    %659 = vmatpush1.msra.mxu0 0.0
    %660 = vmatprep.subr.mxu0 0.0
    %661 = vmatpush1.msra.mxu0 0.0
    %662 = vmatprep.subr.mxu0 0.0
    %663 = vmatpush1.msra.mxu0 0.0
    %664 = vmatprep.subr.mxu0 0.0
    %665 = vmatpush1.msra.mxu0 0.0
    %666 = vmatprep.subr.mxu0 0.0
    %667 = vmatpush1.msra.mxu0 0.0
    %668 = vmatprep.mubr.f32.mxu0 0.0
    %669 = vmatmul.mubr.f32.gmra.mrb[0].mxu0 %v602
    %v670 = vpop.f32.mrb[0].mxu0
    %v671 = vadd.f32 0.0, %v670
    %v672 = vpop.f32.mrb[0].mxu0
    %673 = vdwg.mxu0
    %674 = vmatprep.subr.mxu0 0.0
    %675 = vmatpush1.msra.mxu0 %v357
    %676 = vmatprep.subr.mxu0 0.0
    %677 = vmatpush1.msra.mxu0 %v358
    %678 = vmatprep.subr.mxu0 0.0
    %679 = vmatpush1.msra.mxu0 %v359
    %680 = vmatprep.subr.mxu0 0.0
    %681 = vmatpush1.msra.mxu0 %v360
    %682 = vmatprep.subr.mxu0 0.0
    %683 = vmatpush1.msra.mxu0 0.0
    %684 = vmatprep.subr.mxu0 0.0
    %685 = vmatpush1.msra.mxu0 0.0
    %686 = vmatprep.subr.mxu0 0.0
    %687 = vmatpush1.msra.mxu0 0.0
    %688 = vmatprep.subr.mxu0 0.0
    %689 = vmatpush1.msra.mxu0 0.0
    %690 = vmatprep.subr.mxu0 0.0
    %691 = vmatpush1.msra.mxu0 0.0
    %692 = vmatprep.subr.mxu0 0.0
    %693 = vmatpush1.msra.mxu0 0.0
    %694 = vmatprep.subr.mxu0 0.0
    %695 = vmatpush1.msra.mxu0 0.0
    %696 = vmatprep.subr.mxu0 0.0
    %697 = vmatpush1.msra.mxu0 0.0
    %698 = vmatprep.subr.mxu0 0.0
    %699 = vmatpush1.msra.mxu0 0.0
    %700 = vmatprep.subr.mxu0 0.0
    %701 = vmatpush1.msra.mxu0 0.0
    %702 = vmatprep.subr.mxu0 0.0
    %703 = vmatpush1.msra.mxu0 0.0
    %704 = vmatprep.subr.mxu0 0.0
    %705 = vmatpush1.msra.mxu0 0.0
    %706 = vmatprep.subr.mxu0 0.0
    %707 = vmatpush1.msra.mxu0 0.0
    %708 = vmatprep.subr.mxu0 0.0
    %709 = vmatpush1.msra.mxu0 0.0
    %710 = vmatprep.subr.mxu0 0.0
    %711 = vmatpush1.msra.mxu0 0.0
    %712 = vmatprep.subr.mxu0 0.0
    %713 = vmatpush1.msra.mxu0 0.0
    %714 = vmatprep.subr.mxu0 0.0
    %715 = vmatpush1.msra.mxu0 0.0
    %716 = vmatprep.subr.mxu0 0.0
    %717 = vmatpush1.msra.mxu0 0.0
    %718 = vmatprep.subr.mxu0 0.0
    %719 = vmatpush1.msra.mxu0 0.0
    %720 = vmatprep.subr.mxu0 0.0
    %721 = vmatpush1.msra.mxu0 0.0
    %722 = vmatprep.subr.mxu0 0.0
    %723 = vmatpush1.msra.mxu0 0.0
    %724 = vmatprep.subr.mxu0 0.0
    %725 = vmatpush1.msra.mxu0 0.0
    %726 = vmatprep.subr.mxu0 0.0
    %727 = vmatpush1.msra.mxu0 0.0
    %728 = vmatprep.subr.mxu0 0.0
    %729 = vmatpush1.msra.mxu0 0.0
    %730 = vmatprep.subr.mxu0 0.0
    %731 = vmatpush1.msra.mxu0 0.0
    %732 = vmatprep.subr.mxu0 0.0
    %733 = vmatpush1.msra.mxu0 0.0
    %734 = vmatprep.subr.mxu0 0.0
    %735 = vmatpush1.msra.mxu0 0.0
    %736 = vmatprep.subr.mxu0 0.0
    %737 = vmatpush1.msra.mxu0 0.0
    %738 = vmatprep.mubr.f32.mxu0 0.0
    %739 = vmatmul.mubr.f32.gmra.mrb[0].mxu0 %v602
    %v740 = vpop.f32.mrb[0].mxu0
    %v741 = vadd.f32 0.0, %v740
    %v742 = vpop.f32.mrb[0].mxu0
    %743 = vdwg.mxu0
    %v745 = vrot.slane %v671, 7
    %v747 = vadd.f32 %v192, %v745
    %v748 = vxor.u32 %v747, 2147483648
    %v749 = vmul.f32 %v748, 1.442695
    %v750 = vpow.pop %v749
    %v751 = vadd.f32 %v750, 1.0
    %v752 = vrcp.pop %v751
    %v753 = vmul.f32 1.0, %v752
    %v755 = vrot.slane %v741, 7
    %v757 = vadd.f32 %v271, %v755
    %v758 = vxor.u32 %v757, 2147483648
    %v759 = vmul.f32 %v758, 1.442695
    %v760 = vpow.pop %v759
    %v761 = vadd.f32 %v760, 1.0
    %v762 = vrcp.pop %v761
    %v763 = vmul.f32 1.0, %v762
    %764 = vmatprep.subr.mxu0 0.0
    %765 = vmatpush1.msra.mxu0 %v361
    %766 = vmatprep.subr.mxu0 0.0
    %767 = vmatpush1.msra.mxu0 %v362
    %768 = vmatprep.subr.mxu0 0.0
    %769 = vmatpush1.msra.mxu0 %v363
    %770 = vmatprep.subr.mxu0 0.0
    %771 = vmatpush1.msra.mxu0 %v364
    %772 = vmatprep.subr.mxu0 0.0
    %773 = vmatpush1.msra.mxu0 0.0
    %774 = vmatprep.subr.mxu0 0.0
    %775 = vmatpush1.msra.mxu0 0.0
    %776 = vmatprep.subr.mxu0 0.0
    %777 = vmatpush1.msra.mxu0 0.0
    %778 = vmatprep.subr.mxu0 0.0
    %779 = vmatpush1.msra.mxu0 0.0
    %780 = vmatprep.subr.mxu0 0.0
    %781 = vmatpush1.msra.mxu0 0.0
    %782 = vmatprep.subr.mxu0 0.0
    %783 = vmatpush1.msra.mxu0 0.0
    %784 = vmatprep.subr.mxu0 0.0
    %785 = vmatpush1.msra.mxu0 0.0
    %786 = vmatprep.subr.mxu0 0.0
    %787 = vmatpush1.msra.mxu0 0.0
    %788 = vmatprep.subr.mxu0 0.0
    %789 = vmatpush1.msra.mxu0 0.0
    %790 = vmatprep.subr.mxu0 0.0
    %791 = vmatpush1.msra.mxu0 0.0
    %792 = vmatprep.subr.mxu0 0.0
    %793 = vmatpush1.msra.mxu0 0.0
    %794 = vmatprep.subr.mxu0 0.0
    %795 = vmatpush1.msra.mxu0 0.0
    %796 = vmatprep.subr.mxu0 0.0
    %797 = vmatpush1.msra.mxu0 0.0
    %798 = vmatprep.subr.mxu0 0.0
    %799 = vmatpush1.msra.mxu0 0.0
    %800 = vmatprep.subr.mxu0 0.0
    %801 = vmatpush1.msra.mxu0 0.0
    %802 = vmatprep.subr.mxu0 0.0
    %803 = vmatpush1.msra.mxu0 0.0
    %804 = vmatprep.subr.mxu0 0.0
    %805 = vmatpush1.msra.mxu0 0.0
    %806 = vmatprep.subr.mxu0 0.0
    %807 = vmatpush1.msra.mxu0 0.0
    %808 = vmatprep.subr.mxu0 0.0
    %809 = vmatpush1.msra.mxu0 0.0
    %810 = vmatprep.subr.mxu0 0.0
    %811 = vmatpush1.msra.mxu0 0.0
    %812 = vmatprep.subr.mxu0 0.0
    %813 = vmatpush1.msra.mxu0 0.0
    %814 = vmatprep.subr.mxu0 0.0
    %815 = vmatpush1.msra.mxu0 0.0
    %816 = vmatprep.subr.mxu0 0.0
    %817 = vmatpush1.msra.mxu0 0.0
    %818 = vmatprep.subr.mxu0 0.0
    %819 = vmatpush1.msra.mxu0 0.0
    %820 = vmatprep.subr.mxu0 0.0
    %821 = vmatpush1.msra.mxu0 0.0
    %822 = vmatprep.subr.mxu0 0.0
    %823 = vmatpush1.msra.mxu0 0.0
    %824 = vmatprep.subr.mxu0 0.0
    %825 = vmatpush1.msra.mxu0 0.0
    %826 = vmatprep.subr.mxu0 0.0
    %827 = vmatpush1.msra.mxu0 0.0
    %828 = vmatprep.mubr.f32.mxu0 0.0
    %829 = vmatmul.mubr.f32.gmra.mrb[0].mxu0 %v602
    %v830 = vpop.f32.mrb[0].mxu0
    %v831 = vadd.f32 %v365, %v830
    %v832 = vpop.f32.mrb[0].mxu0
    %833 = vdwg.mxu0
    %v835 = vrot.slane %v831, 7
    %v837 = vmul.f32 %v753, %v835
    %v838 = vadd.f32 %v350, %v837
    %v839 = vtanh.pop %v838
    %v840 = vsub.f32 1.0, %v763
    %v841 = vmul.f32 %v840, %v839
    %v842 = vrot.slane %v600, 7
    %v844 = vmul.f32 %v763, %v842
    %v845 = vadd.f32 %v841, %v844
    %v847 = vrot.slane %v845, 1
    %v848 = vsel %vm366, %v847, 0
    %850 = vmatprep.subr.mxu0 0.0
    %851 = vmatpush1.msra.mxu0 %v353
    %852 = vmatprep.subr.mxu0 0.0
    %853 = vmatpush1.msra.mxu0 %v354
    %854 = vmatprep.subr.mxu0 0.0
    %855 = vmatpush1.msra.mxu0 %v355
    %856 = vmatprep.subr.mxu0 0.0
    %857 = vmatpush1.msra.mxu0 %v356
    %858 = vmatprep.subr.mxu0 0.0
    %859 = vmatpush1.msra.mxu0 0.0
    %860 = vmatprep.subr.mxu0 0.0
    %861 = vmatpush1.msra.mxu0 0.0
    %862 = vmatprep.subr.mxu0 0.0
    %863 = vmatpush1.msra.mxu0 0.0
    %864 = vmatprep.subr.mxu0 0.0
    %865 = vmatpush1.msra.mxu0 0.0
    %866 = vmatprep.subr.mxu0 0.0
    %867 = vmatpush1.msra.mxu0 0.0
    %868 = vmatprep.subr.mxu0 0.0
    %869 = vmatpush1.msra.mxu0 0.0
    %870 = vmatprep.subr.mxu0 0.0
    %871 = vmatpush1.msra.mxu0 0.0
    %872 = vmatprep.subr.mxu0 0.0
    %873 = vmatpush1.msra.mxu0 0.0
    %874 = vmatprep.subr.mxu0 0.0
    %875 = vmatpush1.msra.mxu0 0.0
    %876 = vmatprep.subr.mxu0 0.0
    %877 = vmatpush1.msra.mxu0 0.0
    %878 = vmatprep.subr.mxu0 0.0
    %879 = vmatpush1.msra.mxu0 0.0
    %880 = vmatprep.subr.mxu0 0.0
    %881 = vmatpush1.msra.mxu0 0.0
    %882 = vmatprep.subr.mxu0 0.0
    %883 = vmatpush1.msra.mxu0 0.0
    %884 = vmatprep.subr.mxu0 0.0
    %885 = vmatpush1.msra.mxu0 0.0
    %886 = vmatprep.subr.mxu0 0.0
    %887 = vmatpush1.msra.mxu0 0.0
    %888 = vmatprep.subr.mxu0 0.0
    %889 = vmatpush1.msra.mxu0 0.0
    %890 = vmatprep.subr.mxu0 0.0
    %891 = vmatpush1.msra.mxu0 0.0
    %892 = vmatprep.subr.mxu0 0.0
    %893 = vmatpush1.msra.mxu0 0.0
    %894 = vmatprep.subr.mxu0 0.0
    %895 = vmatpush1.msra.mxu0 0.0
    %896 = vmatprep.subr.mxu0 0.0
    %897 = vmatpush1.msra.mxu0 0.0
    %898 = vmatprep.subr.mxu0 0.0
    %899 = vmatpush1.msra.mxu0 0.0
    %900 = vmatprep.subr.mxu0 0.0
    %901 = vmatpush1.msra.mxu0 0.0
    %902 = vmatprep.subr.mxu0 0.0
    %903 = vmatpush1.msra.mxu0 0.0
    %904 = vmatprep.subr.mxu0 0.0
    %905 = vmatpush1.msra.mxu0 0.0
    %906 = vmatprep.subr.mxu0 0.0
    %907 = vmatpush1.msra.mxu0 0.0
    %908 = vmatprep.subr.mxu0 0.0
    %909 = vmatpush1.msra.mxu0 0.0
    %910 = vmatprep.subr.mxu0 0.0
    %911 = vmatpush1.msra.mxu0 0.0
    %912 = vmatprep.subr.mxu0 0.0
    %913 = vmatpush1.msra.mxu0 0.0
    %914 = vmatprep.mubr.f32.mxu0 0.0
    %915 = vmatmul.mubr.f32.gmra.mrb[0].mxu0 %v848
    %v916 = vpop.f32.mrb[0].mxu0
    %v917 = vadd.f32 0.0, %v916
    %v918 = vpop.f32.mrb[0].mxu0
    %919 = vdwg.mxu0
    %920 = vmatprep.subr.mxu0 0.0
    %921 = vmatpush1.msra.mxu0 %v357
    %922 = vmatprep.subr.mxu0 0.0
    %923 = vmatpush1.msra.mxu0 %v358
    %924 = vmatprep.subr.mxu0 0.0
    %925 = vmatpush1.msra.mxu0 %v359
    %926 = vmatprep.subr.mxu0 0.0
    %927 = vmatpush1.msra.mxu0 %v360
    %928 = vmatprep.subr.mxu0 0.0
    %929 = vmatpush1.msra.mxu0 0.0
    %930 = vmatprep.subr.mxu0 0.0
    %931 = vmatpush1.msra.mxu0 0.0
    %932 = vmatprep.subr.mxu0 0.0
    %933 = vmatpush1.msra.mxu0 0.0
    %934 = vmatprep.subr.mxu0 0.0
    %935 = vmatpush1.msra.mxu0 0.0
    %936 = vmatprep.subr.mxu0 0.0
    %937 = vmatpush1.msra.mxu0 0.0
    %938 = vmatprep.subr.mxu0 0.0
    %939 = vmatpush1.msra.mxu0 0.0
    %940 = vmatprep.subr.mxu0 0.0
    %941 = vmatpush1.msra.mxu0 0.0
    %942 = vmatprep.subr.mxu0 0.0
    %943 = vmatpush1.msra.mxu0 0.0
    %944 = vmatprep.subr.mxu0 0.0
    %945 = vmatpush1.msra.mxu0 0.0
    %946 = vmatprep.subr.mxu0 0.0
    %947 = vmatpush1.msra.mxu0 0.0
    %948 = vmatprep.subr.mxu0 0.0
    %949 = vmatpush1.msra.mxu0 0.0
    %950 = vmatprep.subr.mxu0 0.0
    %951 = vmatpush1.msra.mxu0 0.0
    %952 = vmatprep.subr.mxu0 0.0
    %953 = vmatpush1.msra.mxu0 0.0
    %954 = vmatprep.subr.mxu0 0.0
    %955 = vmatpush1.msra.mxu0 0.0
    %956 = vmatprep.subr.mxu0 0.0
    %957 = vmatpush1.msra.mxu0 0.0
    %958 = vmatprep.subr.mxu0 0.0
    %959 = vmatpush1.msra.mxu0 0.0
    %960 = vmatprep.subr.mxu0 0.0
    %961 = vmatpush1.msra.mxu0 0.0
    %962 = vmatprep.subr.mxu0 0.0
    %963 = vmatpush1.msra.mxu0 0.0
    %964 = vmatprep.subr.mxu0 0.0
    %965 = vmatpush1.msra.mxu0 0.0
    %966 = vmatprep.subr.mxu0 0.0
    %967 = vmatpush1.msra.mxu0 0.0
    %968 = vmatprep.subr.mxu0 0.0
    %969 = vmatpush1.msra.mxu0 0.0
    %970 = vmatprep.subr.mxu0 0.0
    %971 = vmatpush1.msra.mxu0 0.0
    %972 = vmatprep.subr.mxu0 0.0
    %973 = vmatpush1.msra.mxu0 0.0
    %974 = vmatprep.subr.mxu0 0.0
    %975 = vmatpush1.msra.mxu0 0.0
    %976 = vmatprep.subr.mxu0 0.0
    %977 = vmatpush1.msra.mxu0 0.0
    %978 = vmatprep.subr.mxu0 0.0
    %979 = vmatpush1.msra.mxu0 0.0
    %980 = vmatprep.subr.mxu0 0.0
    %981 = vmatpush1.msra.mxu0 0.0
    %982 = vmatprep.subr.mxu0 0.0
    %983 = vmatpush1.msra.mxu0 0.0
    %984 = vmatprep.mubr.f32.mxu0 0.0
    %985 = vmatmul.mubr.f32.gmra.mrb[0].mxu0 %v848
    %v986 = vpop.f32.mrb[0].mxu0
    %v987 = vadd.f32 0.0, %v986
    %v988 = vpop.f32.mrb[0].mxu0
    %989 = vdwg.mxu0
    %v991 = vrot.slane %v917, 6
    %v993 = vadd.f32 %v192, %v991
    %v994 = vxor.u32 %v993, 2147483648
    %v995 = vmul.f32 %v994, 1.442695
    %v996 = vpow.pop %v995
    %v997 = vadd.f32 %v996, 1.0
    %v998 = vrcp.pop %v997
    %v999 = vmul.f32 1.0, %v998
    %v1001 = vrot.slane %v987, 6
    %v1003 = vadd.f32 %v271, %v1001
    %v1004 = vxor.u32 %v1003, 2147483648
    %v1005 = vmul.f32 %v1004, 1.442695
    %v1006 = vpow.pop %v1005
    %v1007 = vadd.f32 %v1006, 1.0
    %v1008 = vrcp.pop %v1007
    %v1009 = vmul.f32 1.0, %v1008
    %1010 = vmatprep.subr.mxu0 0.0
    %1011 = vmatpush1.msra.mxu0 %v361
    %1012 = vmatprep.subr.mxu0 0.0
    %1013 = vmatpush1.msra.mxu0 %v362
    %1014 = vmatprep.subr.mxu0 0.0
    %1015 = vmatpush1.msra.mxu0 %v363
    %1016 = vmatprep.subr.mxu0 0.0
    %1017 = vmatpush1.msra.mxu0 %v364
    %1018 = vmatprep.subr.mxu0 0.0
    %1019 = vmatpush1.msra.mxu0 0.0
    %1020 = vmatprep.subr.mxu0 0.0
    %1021 = vmatpush1.msra.mxu0 0.0
    %1022 = vmatprep.subr.mxu0 0.0
    %1023 = vmatpush1.msra.mxu0 0.0
    %1024 = vmatprep.subr.mxu0 0.0
    %1025 = vmatpush1.msra.mxu0 0.0
    %1026 = vmatprep.subr.mxu0 0.0
    %1027 = vmatpush1.msra.mxu0 0.0
    %1028 = vmatprep.subr.mxu0 0.0
    %1029 = vmatpush1.msra.mxu0 0.0
    %1030 = vmatprep.subr.mxu0 0.0
    %1031 = vmatpush1.msra.mxu0 0.0
    %1032 = vmatprep.subr.mxu0 0.0
    %1033 = vmatpush1.msra.mxu0 0.0
    %1034 = vmatprep.subr.mxu0 0.0
    %1035 = vmatpush1.msra.mxu0 0.0
    %1036 = vmatprep.subr.mxu0 0.0
    %1037 = vmatpush1.msra.mxu0 0.0
    %1038 = vmatprep.subr.mxu0 0.0
    %1039 = vmatpush1.msra.mxu0 0.0
    %1040 = vmatprep.subr.mxu0 0.0
    %1041 = vmatpush1.msra.mxu0 0.0
    %1042 = vmatprep.subr.mxu0 0.0
    %1043 = vmatpush1.msra.mxu0 0.0
    %1044 = vmatprep.subr.mxu0 0.0
    %1045 = vmatpush1.msra.mxu0 0.0
    %1046 = vmatprep.subr.mxu0 0.0
    %1047 = vmatpush1.msra.mxu0 0.0
    %1048 = vmatprep.subr.mxu0 0.0
    %1049 = vmatpush1.msra.mxu0 0.0
    %1050 = vmatprep.subr.mxu0 0.0
    %1051 = vmatpush1.msra.mxu0 0.0
    %1052 = vmatprep.subr.mxu0 0.0
    %1053 = vmatpush1.msra.mxu0 0.0
    %1054 = vmatprep.subr.mxu0 0.0
    %1055 = vmatpush1.msra.mxu0 0.0
    %1056 = vmatprep.subr.mxu0 0.0
    %1057 = vmatpush1.msra.mxu0 0.0
    %1058 = vmatprep.subr.mxu0 0.0
    %1059 = vmatpush1.msra.mxu0 0.0
    %1060 = vmatprep.subr.mxu0 0.0
    %1061 = vmatpush1.msra.mxu0 0.0
    %1062 = vmatprep.subr.mxu0 0.0
    %1063 = vmatpush1.msra.mxu0 0.0
    %1064 = vmatprep.subr.mxu0 0.0
    %1065 = vmatpush1.msra.mxu0 0.0
    %1066 = vmatprep.subr.mxu0 0.0
    %1067 = vmatpush1.msra.mxu0 0.0
    %1068 = vmatprep.subr.mxu0 0.0
    %1069 = vmatpush1.msra.mxu0 0.0
    %1070 = vmatprep.subr.mxu0 0.0
    %1071 = vmatpush1.msra.mxu0 0.0
    %1072 = vmatprep.subr.mxu0 0.0
    %1073 = vmatpush1.msra.mxu0 0.0
    %1074 = vmatprep.mubr.f32.mxu0 0.0
    %1075 = vmatmul.mubr.f32.gmra.mrb[0].mxu0 %v848
    %v1076 = vpop.f32.mrb[0].mxu0
    %v1077 = vadd.f32 %v365, %v1076
    %v1078 = vpop.f32.mrb[0].mxu0
    %1079 = vdwg.mxu0
    %v1081 = vrot.slane %v1077, 6
    %v1083 = vmul.f32 %v999, %v1081
    %v1084 = vadd.f32 %v350, %v1083
    %v1085 = vtanh.pop %v1084
    %v1086 = vsub.f32 1.0, %v1009
    %v1087 = vmul.f32 %v1086, %v1085
    %v1088 = vrot.slane %v845, 7
    %v1090 = vmul.f32 %v1009, %v1088
    %v1091 = vadd.f32 %v1087, %v1090
    %v1093 = vrot.slane %v1091, 2
    %v1094 = vsel %vm366, %v1093, 0
    %1096 = vmatprep.subr.mxu0 0.0
    %1097 = vmatpush1.msra.mxu0 %v353
    %1098 = vmatprep.subr.mxu0 0.0
    %1099 = vmatpush1.msra.mxu0 %v354
    %1100 = vmatprep.subr.mxu0 0.0
    %1101 = vmatpush1.msra.mxu0 %v355
    %1102 = vmatprep.subr.mxu0 0.0
    %1103 = vmatpush1.msra.mxu0 %v356
    %1104 = vmatprep.subr.mxu0 0.0
    %1105 = vmatpush1.msra.mxu0 0.0
    %1106 = vmatprep.subr.mxu0 0.0
    %1107 = vmatpush1.msra.mxu0 0.0
    %1108 = vmatprep.subr.mxu0 0.0
    %1109 = vmatpush1.msra.mxu0 0.0
    %1110 = vmatprep.subr.mxu0 0.0
    %1111 = vmatpush1.msra.mxu0 0.0
    %1112 = vmatprep.subr.mxu0 0.0
    %1113 = vmatpush1.msra.mxu0 0.0
    %1114 = vmatprep.subr.mxu0 0.0
    %1115 = vmatpush1.msra.mxu0 0.0
    %1116 = vmatprep.subr.mxu0 0.0
    %1117 = vmatpush1.msra.mxu0 0.0
    %1118 = vmatprep.subr.mxu0 0.0
    %1119 = vmatpush1.msra.mxu0 0.0
    %1120 = vmatprep.subr.mxu0 0.0
    %1121 = vmatpush1.msra.mxu0 0.0
    %1122 = vmatprep.subr.mxu0 0.0
    %1123 = vmatpush1.msra.mxu0 0.0
    %1124 = vmatprep.subr.mxu0 0.0
    %1125 = vmatpush1.msra.mxu0 0.0
    %1126 = vmatprep.subr.mxu0 0.0
    %1127 = vmatpush1.msra.mxu0 0.0
    %1128 = vmatprep.subr.mxu0 0.0
    %1129 = vmatpush1.msra.mxu0 0.0
    %1130 = vmatprep.subr.mxu0 0.0
    %1131 = vmatpush1.msra.mxu0 0.0
    %1132 = vmatprep.subr.mxu0 0.0
    %1133 = vmatpush1.msra.mxu0 0.0
    %1134 = vmatprep.subr.mxu0 0.0
    %1135 = vmatpush1.msra.mxu0 0.0
    %1136 = vmatprep.subr.mxu0 0.0
    %1137 = vmatpush1.msra.mxu0 0.0
    %1138 = vmatprep.subr.mxu0 0.0
    %1139 = vmatpush1.msra.mxu0 0.0
    %1140 = vmatprep.subr.mxu0 0.0
    %1141 = vmatpush1.msra.mxu0 0.0
    %1142 = vmatprep.subr.mxu0 0.0
    %1143 = vmatpush1.msra.mxu0 0.0
    %1144 = vmatprep.subr.mxu0 0.0
    %1145 = vmatpush1.msra.mxu0 0.0
    %1146 = vmatprep.subr.mxu0 0.0
    %1147 = vmatpush1.msra.mxu0 0.0
    %1148 = vmatprep.subr.mxu0 0.0
    %1149 = vmatpush1.msra.mxu0 0.0
    %1150 = vmatprep.subr.mxu0 0.0
    %1151 = vmatpush1.msra.mxu0 0.0
    %1152 = vmatprep.subr.mxu0 0.0
    %1153 = vmatpush1.msra.mxu0 0.0
    %1154 = vmatprep.subr.mxu0 0.0
    %1155 = vmatpush1.msra.mxu0 0.0
    %1156 = vmatprep.subr.mxu0 0.0
    %1157 = vmatpush1.msra.mxu0 0.0
    %1158 = vmatprep.subr.mxu0 0.0
    %1159 = vmatpush1.msra.mxu0 0.0
    %1160 = vmatprep.mubr.f32.mxu0 0.0
    %1161 = vmatmul.mubr.f32.gmra.mrb[0].mxu0 %v1094
    %v1162 = vpop.f32.mrb[0].mxu0
    %v1163 = vadd.f32 0.0, %v1162
    %v1164 = vpop.f32.mrb[0].mxu0
    %1165 = vdwg.mxu0
    %1166 = vmatprep.subr.mxu0 0.0
    %1167 = vmatpush1.msra.mxu0 %v357
    %1168 = vmatprep.subr.mxu0 0.0
    %1169 = vmatpush1.msra.mxu0 %v358
    %1170 = vmatprep.subr.mxu0 0.0
    %1171 = vmatpush1.msra.mxu0 %v359
    %1172 = vmatprep.subr.mxu0 0.0
    %1173 = vmatpush1.msra.mxu0 %v360
    %1174 = vmatprep.subr.mxu0 0.0
    %1175 = vmatpush1.msra.mxu0 0.0
    %1176 = vmatprep.subr.mxu0 0.0
    %1177 = vmatpush1.msra.mxu0 0.0
    %1178 = vmatprep.subr.mxu0 0.0
    %1179 = vmatpush1.msra.mxu0 0.0
    %1180 = vmatprep.subr.mxu0 0.0
    %1181 = vmatpush1.msra.mxu0 0.0
    %1182 = vmatprep.subr.mxu0 0.0
    %1183 = vmatpush1.msra.mxu0 0.0
    %1184 = vmatprep.subr.mxu0 0.0
    %1185 = vmatpush1.msra.mxu0 0.0
    %1186 = vmatprep.subr.mxu0 0.0
    %1187 = vmatpush1.msra.mxu0 0.0
    %1188 = vmatprep.subr.mxu0 0.0
    %1189 = vmatpush1.msra.mxu0 0.0
    %1190 = vmatprep.subr.mxu0 0.0
    %1191 = vmatpush1.msra.mxu0 0.0
    %1192 = vmatprep.subr.mxu0 0.0
    %1193 = vmatpush1.msra.mxu0 0.0
    %1194 = vmatprep.subr.mxu0 0.0
    %1195 = vmatpush1.msra.mxu0 0.0
    %1196 = vmatprep.subr.mxu0 0.0
    %1197 = vmatpush1.msra.mxu0 0.0
    %1198 = vmatprep.subr.mxu0 0.0
    %1199 = vmatpush1.msra.mxu0 0.0
    %1200 = vmatprep.subr.mxu0 0.0
    %1201 = vmatpush1.msra.mxu0 0.0
    %1202 = vmatprep.subr.mxu0 0.0
    %1203 = vmatpush1.msra.mxu0 0.0
    %1204 = vmatprep.subr.mxu0 0.0
    %1205 = vmatpush1.msra.mxu0 0.0
    %1206 = vmatprep.subr.mxu0 0.0
    %1207 = vmatpush1.msra.mxu0 0.0
    %1208 = vmatprep.subr.mxu0 0.0
    %1209 = vmatpush1.msra.mxu0 0.0
    %1210 = vmatprep.subr.mxu0 0.0
    %1211 = vmatpush1.msra.mxu0 0.0
    %1212 = vmatprep.subr.mxu0 0.0
    %1213 = vmatpush1.msra.mxu0 0.0
    %1214 = vmatprep.subr.mxu0 0.0
    %1215 = vmatpush1.msra.mxu0 0.0
    %1216 = vmatprep.subr.mxu0 0.0
    %1217 = vmatpush1.msra.mxu0 0.0
    %1218 = vmatprep.subr.mxu0 0.0
    %1219 = vmatpush1.msra.mxu0 0.0
    %1220 = vmatprep.subr.mxu0 0.0
    %1221 = vmatpush1.msra.mxu0 0.0
    %1222 = vmatprep.subr.mxu0 0.0
    %1223 = vmatpush1.msra.mxu0 0.0
    %1224 = vmatprep.subr.mxu0 0.0
    %1225 = vmatpush1.msra.mxu0 0.0
    %1226 = vmatprep.subr.mxu0 0.0
    %1227 = vmatpush1.msra.mxu0 0.0
    %1228 = vmatprep.subr.mxu0 0.0
    %1229 = vmatpush1.msra.mxu0 0.0
    %1230 = vmatprep.mubr.f32.mxu0 0.0
    %1231 = vmatmul.mubr.f32.gmra.mrb[0].mxu0 %v1094
    %v1232 = vpop.f32.mrb[0].mxu0
    %v1233 = vadd.f32 0.0, %v1232
    %v1234 = vpop.f32.mrb[0].mxu0
    %1235 = vdwg.mxu0
    %v1237 = vrot.slane %v1163, 5
    %v1239 = vadd.f32 %v192, %v1237
    %v1240 = vxor.u32 %v1239, 2147483648
    %v1241 = vmul.f32 %v1240, 1.442695
    %v1242 = vpow.pop %v1241
    %v1243 = vadd.f32 %v1242, 1.0
    %v1244 = vrcp.pop %v1243
    %v1245 = vmul.f32 1.0, %v1244
    %v1247 = vrot.slane %v1233, 5
    %v1249 = vadd.f32 %v271, %v1247
    %v1250 = vxor.u32 %v1249, 2147483648
    %v1251 = vmul.f32 %v1250, 1.442695
    %v1252 = vpow.pop %v1251
    %v1253 = vadd.f32 %v1252, 1.0
    %v1254 = vrcp.pop %v1253
    %v1255 = vmul.f32 1.0, %v1254
    %1256 = vmatprep.subr.mxu0 0.0
    %1257 = vmatpush1.msra.mxu0 %v361
    %1258 = vmatprep.subr.mxu0 0.0
    %1259 = vmatpush1.msra.mxu0 %v362
    %1260 = vmatprep.subr.mxu0 0.0
    %1261 = vmatpush1.msra.mxu0 %v363
    %1262 = vmatprep.subr.mxu0 0.0
    %1263 = vmatpush1.msra.mxu0 %v364
    %1264 = vmatprep.subr.mxu0 0.0
    %1265 = vmatpush1.msra.mxu0 0.0
    %1266 = vmatprep.subr.mxu0 0.0
    %1267 = vmatpush1.msra.mxu0 0.0
    %1268 = vmatprep.subr.mxu0 0.0
    %1269 = vmatpush1.msra.mxu0 0.0
    %1270 = vmatprep.subr.mxu0 0.0
    %1271 = vmatpush1.msra.mxu0 0.0
    %1272 = vmatprep.subr.mxu0 0.0
    %1273 = vmatpush1.msra.mxu0 0.0
    %1274 = vmatprep.subr.mxu0 0.0
    %1275 = vmatpush1.msra.mxu0 0.0
    %1276 = vmatprep.subr.mxu0 0.0
    %1277 = vmatpush1.msra.mxu0 0.0
    %1278 = vmatprep.subr.mxu0 0.0
    %1279 = vmatpush1.msra.mxu0 0.0
    %1280 = vmatprep.subr.mxu0 0.0
    %1281 = vmatpush1.msra.mxu0 0.0
    %1282 = vmatprep.subr.mxu0 0.0
    %1283 = vmatpush1.msra.mxu0 0.0
    %1284 = vmatprep.subr.mxu0 0.0
    %1285 = vmatpush1.msra.mxu0 0.0
    %1286 = vmatprep.subr.mxu0 0.0
    %1287 = vmatpush1.msra.mxu0 0.0
    %1288 = vmatprep.subr.mxu0 0.0
    %1289 = vmatpush1.msra.mxu0 0.0
    %1290 = vmatprep.subr.mxu0 0.0
    %1291 = vmatpush1.msra.mxu0 0.0
    %1292 = vmatprep.subr.mxu0 0.0
    %1293 = vmatpush1.msra.mxu0 0.0
    %1294 = vmatprep.subr.mxu0 0.0
    %1295 = vmatpush1.msra.mxu0 0.0
    %1296 = vmatprep.subr.mxu0 0.0
    %1297 = vmatpush1.msra.mxu0 0.0
    %1298 = vmatprep.subr.mxu0 0.0
    %1299 = vmatpush1.msra.mxu0 0.0
    %1300 = vmatprep.subr.mxu0 0.0
    %1301 = vmatpush1.msra.mxu0 0.0
    %1302 = vmatprep.subr.mxu0 0.0
    %1303 = vmatpush1.msra.mxu0 0.0
    %1304 = vmatprep.subr.mxu0 0.0
    %1305 = vmatpush1.msra.mxu0 0.0
    %1306 = vmatprep.subr.mxu0 0.0
    %1307 = vmatpush1.msra.mxu0 0.0
    %1308 = vmatprep.subr.mxu0 0.0
    %1309 = vmatpush1.msra.mxu0 0.0
    %1310 = vmatprep.subr.mxu0 0.0
    %1311 = vmatpush1.msra.mxu0 0.0
    %1312 = vmatprep.subr.mxu0 0.0
    %1313 = vmatpush1.msra.mxu0 0.0
    %1314 = vmatprep.subr.mxu0 0.0
    %1315 = vmatpush1.msra.mxu0 0.0
    %1316 = vmatprep.subr.mxu0 0.0
    %1317 = vmatpush1.msra.mxu0 0.0
    %1318 = vmatprep.subr.mxu0 0.0
    %1319 = vmatpush1.msra.mxu0 0.0
    %1320 = vmatprep.mubr.f32.mxu0 0.0
    %1321 = vmatmul.mubr.f32.gmra.mrb[0].mxu0 %v1094
    %v1322 = vpop.f32.mrb[0].mxu0
    %v1323 = vadd.f32 %v365, %v1322
    %v1324 = vpop.f32.mrb[0].mxu0
    %1325 = vdwg.mxu0
    %v1327 = vrot.slane %v1323, 5
    %v1329 = vmul.f32 %v1245, %v1327
    %v1330 = vadd.f32 %v350, %v1329
    %v1331 = vtanh.pop %v1330
    %v1332 = vsub.f32 1.0, %v1255
    %v1333 = vmul.f32 %v1332, %v1331
    %v1334 = vrot.slane %v1091, 7
    %v1336 = vmul.f32 %v1255, %v1334
    %v1337 = vadd.f32 %v1333, %v1336
    %v1339 = vrot.slane %v1337, 3
    %v1340 = vsel %vm366, %v1339, 0
    %1342 = vmatprep.subr.mxu0 0.0
    %1343 = vmatpush1.msra.mxu0 %v353
    %1344 = vmatprep.subr.mxu0 0.0
    %1345 = vmatpush1.msra.mxu0 %v354
    %1346 = vmatprep.subr.mxu0 0.0
    %1347 = vmatpush1.msra.mxu0 %v355
    %1348 = vmatprep.subr.mxu0 0.0
    %1349 = vmatpush1.msra.mxu0 %v356
    %1350 = vmatprep.subr.mxu0 0.0
    %1351 = vmatpush1.msra.mxu0 0.0
    %1352 = vmatprep.subr.mxu0 0.0
    %1353 = vmatpush1.msra.mxu0 0.0
    %1354 = vmatprep.subr.mxu0 0.0
    %1355 = vmatpush1.msra.mxu0 0.0
    %1356 = vmatprep.subr.mxu0 0.0
    %1357 = vmatpush1.msra.mxu0 0.0
    %1358 = vmatprep.subr.mxu0 0.0
    %1359 = vmatpush1.msra.mxu0 0.0
    %1360 = vmatprep.subr.mxu0 0.0
    %1361 = vmatpush1.msra.mxu0 0.0
    %1362 = vmatprep.subr.mxu0 0.0
    %1363 = vmatpush1.msra.mxu0 0.0
    %1364 = vmatprep.subr.mxu0 0.0
    %1365 = vmatpush1.msra.mxu0 0.0
    %1366 = vmatprep.subr.mxu0 0.0
    %1367 = vmatpush1.msra.mxu0 0.0
    %1368 = vmatprep.subr.mxu0 0.0
    %1369 = vmatpush1.msra.mxu0 0.0
    %1370 = vmatprep.subr.mxu0 0.0
    %1371 = vmatpush1.msra.mxu0 0.0
    %1372 = vmatprep.subr.mxu0 0.0
    %1373 = vmatpush1.msra.mxu0 0.0
    %1374 = vmatprep.subr.mxu0 0.0
    %1375 = vmatpush1.msra.mxu0 0.0
    %1376 = vmatprep.subr.mxu0 0.0
    %1377 = vmatpush1.msra.mxu0 0.0
    %1378 = vmatprep.subr.mxu0 0.0
    %1379 = vmatpush1.msra.mxu0 0.0
    %1380 = vmatprep.subr.mxu0 0.0
    %1381 = vmatpush1.msra.mxu0 0.0
    %1382 = vmatprep.subr.mxu0 0.0
    %1383 = vmatpush1.msra.mxu0 0.0
    %1384 = vmatprep.subr.mxu0 0.0
    %1385 = vmatpush1.msra.mxu0 0.0
    %1386 = vmatprep.subr.mxu0 0.0
    %1387 = vmatpush1.msra.mxu0 0.0
    %1388 = vmatprep.subr.mxu0 0.0
    %1389 = vmatpush1.msra.mxu0 0.0
    %1390 = vmatprep.subr.mxu0 0.0
    %1391 = vmatpush1.msra.mxu0 0.0
    %1392 = vmatprep.subr.mxu0 0.0
    %1393 = vmatpush1.msra.mxu0 0.0
    %1394 = vmatprep.subr.mxu0 0.0
    %1395 = vmatpush1.msra.mxu0 0.0
    %1396 = vmatprep.subr.mxu0 0.0
    %1397 = vmatpush1.msra.mxu0 0.0
    %1398 = vmatprep.subr.mxu0 0.0
    %1399 = vmatpush1.msra.mxu0 0.0
    %1400 = vmatprep.subr.mxu0 0.0
    %1401 = vmatpush1.msra.mxu0 0.0
    %1402 = vmatprep.subr.mxu0 0.0
    %1403 = vmatpush1.msra.mxu0 0.0
    %1404 = vmatprep.subr.mxu0 0.0
    %1405 = vmatpush1.msra.mxu0 0.0
    %1406 = vmatprep.mubr.f32.mxu0 0.0
    %1407 = vmatmul.mubr.f32.gmra.mrb[0].mxu0 %v1340
    %v1408 = vpop.f32.mrb[0].mxu0
    %v1409 = vadd.f32 0.0, %v1408
    %v1410 = vpop.f32.mrb[0].mxu0
    %1411 = vdwg.mxu0
    %1412 = vmatprep.subr.mxu0 0.0
    %1413 = vmatpush1.msra.mxu0 %v357
    %1414 = vmatprep.subr.mxu0 0.0
    %1415 = vmatpush1.msra.mxu0 %v358
    %1416 = vmatprep.subr.mxu0 0.0
    %1417 = vmatpush1.msra.mxu0 %v359
    %1418 = vmatprep.subr.mxu0 0.0
    %1419 = vmatpush1.msra.mxu0 %v360
    %1420 = vmatprep.subr.mxu0 0.0
    %1421 = vmatpush1.msra.mxu0 0.0
    %1422 = vmatprep.subr.mxu0 0.0
    %1423 = vmatpush1.msra.mxu0 0.0
    %1424 = vmatprep.subr.mxu0 0.0
    %1425 = vmatpush1.msra.mxu0 0.0
    %1426 = vmatprep.subr.mxu0 0.0
    %1427 = vmatpush1.msra.mxu0 0.0
    %1428 = vmatprep.subr.mxu0 0.0
    %1429 = vmatpush1.msra.mxu0 0.0
    %1430 = vmatprep.subr.mxu0 0.0
    %1431 = vmatpush1.msra.mxu0 0.0
    %1432 = vmatprep.subr.mxu0 0.0
    %1433 = vmatpush1.msra.mxu0 0.0
    %1434 = vmatprep.subr.mxu0 0.0
    %1435 = vmatpush1.msra.mxu0 0.0
    %1436 = vmatprep.subr.mxu0 0.0
    %1437 = vmatpush1.msra.mxu0 0.0
    %1438 = vmatprep.subr.mxu0 0.0
    %1439 = vmatpush1.msra.mxu0 0.0
    %1440 = vmatprep.subr.mxu0 0.0
    %1441 = vmatpush1.msra.mxu0 0.0
    %1442 = vmatprep.subr.mxu0 0.0
    %1443 = vmatpush1.msra.mxu0 0.0
    %1444 = vmatprep.subr.mxu0 0.0
    %1445 = vmatpush1.msra.mxu0 0.0
    %1446 = vmatprep.subr.mxu0 0.0
    %1447 = vmatpush1.msra.mxu0 0.0
    %1448 = vmatprep.subr.mxu0 0.0
    %1449 = vmatpush1.msra.mxu0 0.0
    %1450 = vmatprep.subr.mxu0 0.0
    %1451 = vmatpush1.msra.mxu0 0.0
    %1452 = vmatprep.subr.mxu0 0.0
    %1453 = vmatpush1.msra.mxu0 0.0
    %1454 = vmatprep.subr.mxu0 0.0
    %1455 = vmatpush1.msra.mxu0 0.0
    %1456 = vmatprep.subr.mxu0 0.0
    %1457 = vmatpush1.msra.mxu0 0.0
    %1458 = vmatprep.subr.mxu0 0.0
    %1459 = vmatpush1.msra.mxu0 0.0
    %1460 = vmatprep.subr.mxu0 0.0
    %1461 = vmatpush1.msra.mxu0 0.0
    %1462 = vmatprep.subr.mxu0 0.0
    %1463 = vmatpush1.msra.mxu0 0.0
    %1464 = vmatprep.subr.mxu0 0.0
    %1465 = vmatpush1.msra.mxu0 0.0
    %1466 = vmatprep.subr.mxu0 0.0
    %1467 = vmatpush1.msra.mxu0 0.0
    %1468 = vmatprep.subr.mxu0 0.0
    %1469 = vmatpush1.msra.mxu0 0.0
    %1470 = vmatprep.subr.mxu0 0.0
    %1471 = vmatpush1.msra.mxu0 0.0
    %1472 = vmatprep.subr.mxu0 0.0
    %1473 = vmatpush1.msra.mxu0 0.0
    %1474 = vmatprep.subr.mxu0 0.0
    %1475 = vmatpush1.msra.mxu0 0.0
    %1476 = vmatprep.mubr.f32.mxu0 0.0
    %1477 = vmatmul.mubr.f32.gmra.mrb[0].mxu0 %v1340
    %v1478 = vpop.f32.mrb[0].mxu0
    %v1479 = vadd.f32 0.0, %v1478
    %v1480 = vpop.f32.mrb[0].mxu0
    %1481 = vdwg.mxu0
    %v1483 = vrot.slane %v1409, 4
    %v1485 = vadd.f32 %v192, %v1483
    %v1486 = vxor.u32 %v1485, 2147483648
    %v1487 = vmul.f32 %v1486, 1.442695
    %v1488 = vpow.pop %v1487
    %v1489 = vadd.f32 %v1488, 1.0
    %v1490 = vrcp.pop %v1489
    %v1491 = vmul.f32 1.0, %v1490
    %v1493 = vrot.slane %v1479, 4
    %v1495 = vadd.f32 %v271, %v1493
    %v1496 = vxor.u32 %v1495, 2147483648
    %v1497 = vmul.f32 %v1496, 1.442695
    %v1498 = vpow.pop %v1497
    %v1499 = vadd.f32 %v1498, 1.0
    %v1500 = vrcp.pop %v1499
    %v1501 = vmul.f32 1.0, %v1500
    %1502 = vmatprep.subr.mxu0 0.0
    %1503 = vmatpush1.msra.mxu0 %v361
    %1504 = vmatprep.subr.mxu0 0.0
    %1505 = vmatpush1.msra.mxu0 %v362
    %1506 = vmatprep.subr.mxu0 0.0
    %1507 = vmatpush1.msra.mxu0 %v363
    %1508 = vmatprep.subr.mxu0 0.0
    %1509 = vmatpush1.msra.mxu0 %v364
    %1510 = vmatprep.subr.mxu0 0.0
    %1511 = vmatpush1.msra.mxu0 0.0
    %1512 = vmatprep.subr.mxu0 0.0
    %1513 = vmatpush1.msra.mxu0 0.0
    %1514 = vmatprep.subr.mxu0 0.0
    %1515 = vmatpush1.msra.mxu0 0.0
    %1516 = vmatprep.subr.mxu0 0.0
    %1517 = vmatpush1.msra.mxu0 0.0
    %1518 = vmatprep.subr.mxu0 0.0
    %1519 = vmatpush1.msra.mxu0 0.0
    %1520 = vmatprep.subr.mxu0 0.0
    %1521 = vmatpush1.msra.mxu0 0.0
    %1522 = vmatprep.subr.mxu0 0.0
    %1523 = vmatpush1.msra.mxu0 0.0
    %1524 = vmatprep.subr.mxu0 0.0
    %1525 = vmatpush1.msra.mxu0 0.0
    %1526 = vmatprep.subr.mxu0 0.0
    %1527 = vmatpush1.msra.mxu0 0.0
    %1528 = vmatprep.subr.mxu0 0.0
    %1529 = vmatpush1.msra.mxu0 0.0
    %1530 = vmatprep.subr.mxu0 0.0
    %1531 = vmatpush1.msra.mxu0 0.0
    %1532 = vmatprep.subr.mxu0 0.0
    %1533 = vmatpush1.msra.mxu0 0.0
    %1534 = vmatprep.subr.mxu0 0.0
    %1535 = vmatpush1.msra.mxu0 0.0
    %1536 = vmatprep.subr.mxu0 0.0
    %1537 = vmatpush1.msra.mxu0 0.0
    %1538 = vmatprep.subr.mxu0 0.0
    %1539 = vmatpush1.msra.mxu0 0.0
    %1540 = vmatprep.subr.mxu0 0.0
    %1541 = vmatpush1.msra.mxu0 0.0
    %1542 = vmatprep.subr.mxu0 0.0
    %1543 = vmatpush1.msra.mxu0 0.0
    %1544 = vmatprep.subr.mxu0 0.0
    %1545 = vmatpush1.msra.mxu0 0.0
    %1546 = vmatprep.subr.mxu0 0.0
    %1547 = vmatpush1.msra.mxu0 0.0
    %1548 = vmatprep.subr.mxu0 0.0
    %1549 = vmatpush1.msra.mxu0 0.0
    %1550 = vmatprep.subr.mxu0 0.0
    %1551 = vmatpush1.msra.mxu0 0.0
    %1552 = vmatprep.subr.mxu0 0.0
    %1553 = vmatpush1.msra.mxu0 0.0
    %1554 = vmatprep.subr.mxu0 0.0
    %1555 = vmatpush1.msra.mxu0 0.0
    %1556 = vmatprep.subr.mxu0 0.0
    %1557 = vmatpush1.msra.mxu0 0.0
    %1558 = vmatprep.subr.mxu0 0.0
    %1559 = vmatpush1.msra.mxu0 0.0
    %1560 = vmatprep.subr.mxu0 0.0
    %1561 = vmatpush1.msra.mxu0 0.0
    %1562 = vmatprep.subr.mxu0 0.0
    %1563 = vmatpush1.msra.mxu0 0.0
    %1564 = vmatprep.subr.mxu0 0.0
    %1565 = vmatpush1.msra.mxu0 0.0
    %1566 = vmatprep.mubr.f32.mxu0 0.0
    %1567 = vmatmul.mubr.f32.gmra.mrb[0].mxu0 %v1340
    %v1568 = vpop.f32.mrb[0].mxu0
    %v1569 = vadd.f32 %v365, %v1568
    %v1570 = vpop.f32.mrb[0].mxu0
    %1571 = vdwg.mxu0
    %v1573 = vrot.slane %v1569, 4
    %v1575 = vmul.f32 %v1491, %v1573
    %v1576 = vadd.f32 %v350, %v1575
    %v1577 = vtanh.pop %v1576
    %v1578 = vsub.f32 1.0, %v1501
    %v1579 = vmul.f32 %v1578, %v1577
    %v1580 = vrot.slane %v1337, 7
    %v1582 = vmul.f32 %v1501, %v1580
    %v1583 = vadd.f32 %v1579, %v1582
    %v1585 = vrot.slane %v1583, 4
    %v1586 = vsel %vm366, %v1585, 0
    %1588 = vmatprep.subr.mxu0 0.0
    %1589 = vmatpush1.msra.mxu0 %v353
    %1590 = vmatprep.subr.mxu0 0.0
    %1591 = vmatpush1.msra.mxu0 %v354
    %1592 = vmatprep.subr.mxu0 0.0
    %1593 = vmatpush1.msra.mxu0 %v355
    %1594 = vmatprep.subr.mxu0 0.0
    %1595 = vmatpush1.msra.mxu0 %v356
    %1596 = vmatprep.subr.mxu0 0.0
    %1597 = vmatpush1.msra.mxu0 0.0
    %1598 = vmatprep.subr.mxu0 0.0
    %1599 = vmatpush1.msra.mxu0 0.0
    %1600 = vmatprep.subr.mxu0 0.0
    %1601 = vmatpush1.msra.mxu0 0.0
    %1602 = vmatprep.subr.mxu0 0.0
    %1603 = vmatpush1.msra.mxu0 0.0
    %1604 = vmatprep.subr.mxu0 0.0
    %1605 = vmatpush1.msra.mxu0 0.0
    %1606 = vmatprep.subr.mxu0 0.0
    %1607 = vmatpush1.msra.mxu0 0.0
    %1608 = vmatprep.subr.mxu0 0.0
    %1609 = vmatpush1.msra.mxu0 0.0
    %1610 = vmatprep.subr.mxu0 0.0
    %1611 = vmatpush1.msra.mxu0 0.0
    %1612 = vmatprep.subr.mxu0 0.0
    %1613 = vmatpush1.msra.mxu0 0.0
    %1614 = vmatprep.subr.mxu0 0.0
    %1615 = vmatpush1.msra.mxu0 0.0
    %1616 = vmatprep.subr.mxu0 0.0
    %1617 = vmatpush1.msra.mxu0 0.0
    %1618 = vmatprep.subr.mxu0 0.0
    %1619 = vmatpush1.msra.mxu0 0.0
    %1620 = vmatprep.subr.mxu0 0.0
    %1621 = vmatpush1.msra.mxu0 0.0
    %1622 = vmatprep.subr.mxu0 0.0
    %1623 = vmatpush1.msra.mxu0 0.0
    %1624 = vmatprep.subr.mxu0 0.0
    %1625 = vmatpush1.msra.mxu0 0.0
    %1626 = vmatprep.subr.mxu0 0.0
    %1627 = vmatpush1.msra.mxu0 0.0
    %1628 = vmatprep.subr.mxu0 0.0
    %1629 = vmatpush1.msra.mxu0 0.0
    %1630 = vmatprep.subr.mxu0 0.0
    %1631 = vmatpush1.msra.mxu0 0.0
    %1632 = vmatprep.subr.mxu0 0.0
    %1633 = vmatpush1.msra.mxu0 0.0
    %1634 = vmatprep.subr.mxu0 0.0
    %1635 = vmatpush1.msra.mxu0 0.0
    %1636 = vmatprep.subr.mxu0 0.0
    %1637 = vmatpush1.msra.mxu0 0.0
    %1638 = vmatprep.subr.mxu0 0.0
    %1639 = vmatpush1.msra.mxu0 0.0
    %1640 = vmatprep.subr.mxu0 0.0
    %1641 = vmatpush1.msra.mxu0 0.0
    %1642 = vmatprep.subr.mxu0 0.0
    %1643 = vmatpush1.msra.mxu0 0.0
    %1644 = vmatprep.subr.mxu0 0.0
    %1645 = vmatpush1.msra.mxu0 0.0
    %1646 = vmatprep.subr.mxu0 0.0
    %1647 = vmatpush1.msra.mxu0 0.0
    %1648 = vmatprep.subr.mxu0 0.0
    %1649 = vmatpush1.msra.mxu0 0.0
    %1650 = vmatprep.subr.mxu0 0.0
    %1651 = vmatpush1.msra.mxu0 0.0
    %1652 = vmatprep.mubr.f32.mxu0 0.0
    %1653 = vmatmul.mubr.f32.gmra.mrb[0].mxu0 %v1586
    %v1654 = vpop.f32.mrb[0].mxu0
    %v1655 = vadd.f32 0.0, %v1654
    %v1656 = vpop.f32.mrb[0].mxu0
    %1657 = vdwg.mxu0
    %1658 = vmatprep.subr.mxu0 0.0
    %1659 = vmatpush1.msra.mxu0 %v357
    %1660 = vmatprep.subr.mxu0 0.0
    %1661 = vmatpush1.msra.mxu0 %v358
    %1662 = vmatprep.subr.mxu0 0.0
    %1663 = vmatpush1.msra.mxu0 %v359
    %1664 = vmatprep.subr.mxu0 0.0
    %1665 = vmatpush1.msra.mxu0 %v360
    %1666 = vmatprep.subr.mxu0 0.0
    %1667 = vmatpush1.msra.mxu0 0.0
    %1668 = vmatprep.subr.mxu0 0.0
    %1669 = vmatpush1.msra.mxu0 0.0
    %1670 = vmatprep.subr.mxu0 0.0
    %1671 = vmatpush1.msra.mxu0 0.0
    %1672 = vmatprep.subr.mxu0 0.0
    %1673 = vmatpush1.msra.mxu0 0.0
    %1674 = vmatprep.subr.mxu0 0.0
    %1675 = vmatpush1.msra.mxu0 0.0
    %1676 = vmatprep.subr.mxu0 0.0
    %1677 = vmatpush1.msra.mxu0 0.0
    %1678 = vmatprep.subr.mxu0 0.0
    %1679 = vmatpush1.msra.mxu0 0.0
    %1680 = vmatprep.subr.mxu0 0.0
    %1681 = vmatpush1.msra.mxu0 0.0
    %1682 = vmatprep.subr.mxu0 0.0
    %1683 = vmatpush1.msra.mxu0 0.0
    %1684 = vmatprep.subr.mxu0 0.0
    %1685 = vmatpush1.msra.mxu0 0.0
    %1686 = vmatprep.subr.mxu0 0.0
    %1687 = vmatpush1.msra.mxu0 0.0
    %1688 = vmatprep.subr.mxu0 0.0
    %1689 = vmatpush1.msra.mxu0 0.0
    %1690 = vmatprep.subr.mxu0 0.0
    %1691 = vmatpush1.msra.mxu0 0.0
    %1692 = vmatprep.subr.mxu0 0.0
    %1693 = vmatpush1.msra.mxu0 0.0
    %1694 = vmatprep.subr.mxu0 0.0
    %1695 = vmatpush1.msra.mxu0 0.0
    %1696 = vmatprep.subr.mxu0 0.0
    %1697 = vmatpush1.msra.mxu0 0.0
    %1698 = vmatprep.subr.mxu0 0.0
    %1699 = vmatpush1.msra.mxu0 0.0
    %1700 = vmatprep.subr.mxu0 0.0
    %1701 = vmatpush1.msra.mxu0 0.0
    %1702 = vmatprep.subr.mxu0 0.0
    %1703 = vmatpush1.msra.mxu0 0.0
    %1704 = vmatprep.subr.mxu0 0.0
    %1705 = vmatpush1.msra.mxu0 0.0
    %1706 = vmatprep.subr.mxu0 0.0
    %1707 = vmatpush1.msra.mxu0 0.0
    %1708 = vmatprep.subr.mxu0 0.0
    %1709 = vmatpush1.msra.mxu0 0.0
    %1710 = vmatprep.subr.mxu0 0.0
    %1711 = vmatpush1.msra.mxu0 0.0
    %1712 = vmatprep.subr.mxu0 0.0
    %1713 = vmatpush1.msra.mxu0 0.0
    %1714 = vmatprep.subr.mxu0 0.0
    %1715 = vmatpush1.msra.mxu0 0.0
    %1716 = vmatprep.subr.mxu0 0.0
    %1717 = vmatpush1.msra.mxu0 0.0
    %1718 = vmatprep.subr.mxu0 0.0
    %1719 = vmatpush1.msra.mxu0 0.0
    %1720 = vmatprep.subr.mxu0 0.0
    %1721 = vmatpush1.msra.mxu0 0.0
    %1722 = vmatprep.mubr.f32.mxu0 0.0
    %1723 = vmatmul.mubr.f32.gmra.mrb[0].mxu0 %v1586
    %v1724 = vpop.f32.mrb[0].mxu0
    %v1725 = vadd.f32 0.0, %v1724
    %v1726 = vpop.f32.mrb[0].mxu0
    %1727 = vdwg.mxu0
    %v1729 = vrot.slane %v1655, 3
    %v1731 = vadd.f32 %v192, %v1729
    %v1732 = vxor.u32 %v1731, 2147483648
    %v1733 = vmul.f32 %v1732, 1.442695
    %v1734 = vpow.pop %v1733
    %v1735 = vadd.f32 %v1734, 1.0
    %v1736 = vrcp.pop %v1735
    %v1737 = vmul.f32 1.0, %v1736
    %v1739 = vrot.slane %v1725, 3
    %v1741 = vadd.f32 %v271, %v1739
    %v1742 = vxor.u32 %v1741, 2147483648
    %v1743 = vmul.f32 %v1742, 1.442695
    %v1744 = vpow.pop %v1743
    %v1745 = vadd.f32 %v1744, 1.0
    %v1746 = vrcp.pop %v1745
    %v1747 = vmul.f32 1.0, %v1746
    %1748 = vmatprep.subr.mxu0 0.0
    %1749 = vmatpush1.msra.mxu0 %v361
    %1750 = vmatprep.subr.mxu0 0.0
    %1751 = vmatpush1.msra.mxu0 %v362
    %1752 = vmatprep.subr.mxu0 0.0
    %1753 = vmatpush1.msra.mxu0 %v363
    %1754 = vmatprep.subr.mxu0 0.0
    %1755 = vmatpush1.msra.mxu0 %v364
    %1756 = vmatprep.subr.mxu0 0.0
    %1757 = vmatpush1.msra.mxu0 0.0
    %1758 = vmatprep.subr.mxu0 0.0
    %1759 = vmatpush1.msra.mxu0 0.0
    %1760 = vmatprep.subr.mxu0 0.0
    %1761 = vmatpush1.msra.mxu0 0.0
    %1762 = vmatprep.subr.mxu0 0.0
    %1763 = vmatpush1.msra.mxu0 0.0
    %1764 = vmatprep.subr.mxu0 0.0
    %1765 = vmatpush1.msra.mxu0 0.0
    %1766 = vmatprep.subr.mxu0 0.0
    %1767 = vmatpush1.msra.mxu0 0.0
    %1768 = vmatprep.subr.mxu0 0.0
    %1769 = vmatpush1.msra.mxu0 0.0
    %1770 = vmatprep.subr.mxu0 0.0
    %1771 = vmatpush1.msra.mxu0 0.0
    %1772 = vmatprep.subr.mxu0 0.0
    %1773 = vmatpush1.msra.mxu0 0.0
    %1774 = vmatprep.subr.mxu0 0.0
    %1775 = vmatpush1.msra.mxu0 0.0
    %1776 = vmatprep.subr.mxu0 0.0
    %1777 = vmatpush1.msra.mxu0 0.0
    %1778 = vmatprep.subr.mxu0 0.0
    %1779 = vmatpush1.msra.mxu0 0.0
    %1780 = vmatprep.subr.mxu0 0.0
    %1781 = vmatpush1.msra.mxu0 0.0
    %1782 = vmatprep.subr.mxu0 0.0
    %1783 = vmatpush1.msra.mxu0 0.0
    %1784 = vmatprep.subr.mxu0 0.0
    %1785 = vmatpush1.msra.mxu0 0.0
    %1786 = vmatprep.subr.mxu0 0.0
    %1787 = vmatpush1.msra.mxu0 0.0
    %1788 = vmatprep.subr.mxu0 0.0
    %1789 = vmatpush1.msra.mxu0 0.0
    %1790 = vmatprep.subr.mxu0 0.0
    %1791 = vmatpush1.msra.mxu0 0.0
    %1792 = vmatprep.subr.mxu0 0.0
    %1793 = vmatpush1.msra.mxu0 0.0
    %1794 = vmatprep.subr.mxu0 0.0
    %1795 = vmatpush1.msra.mxu0 0.0
    %1796 = vmatprep.subr.mxu0 0.0
    %1797 = vmatpush1.msra.mxu0 0.0
    %1798 = vmatprep.subr.mxu0 0.0
    %1799 = vmatpush1.msra.mxu0 0.0
    %1800 = vmatprep.subr.mxu0 0.0
    %1801 = vmatpush1.msra.mxu0 0.0
    %1802 = vmatprep.subr.mxu0 0.0
    %1803 = vmatpush1.msra.mxu0 0.0
    %1804 = vmatprep.subr.mxu0 0.0
    %1805 = vmatpush1.msra.mxu0 0.0
    %1806 = vmatprep.subr.mxu0 0.0
    %1807 = vmatpush1.msra.mxu0 0.0
    %1808 = vmatprep.subr.mxu0 0.0
    %1809 = vmatpush1.msra.mxu0 0.0
    %1810 = vmatprep.subr.mxu0 0.0
    %1811 = vmatpush1.msra.mxu0 0.0
    %1812 = vmatprep.mubr.f32.mxu0 0.0
    %1813 = vmatmul.mubr.f32.gmra.mrb[0].mxu0 %v1586
    %v1814 = vpop.f32.mrb[0].mxu0
    %v1815 = vadd.f32 %v365, %v1814
    %v1816 = vpop.f32.mrb[0].mxu0
    %1817 = vdwg.mxu0
    %v1819 = vrot.slane %v1815, 3
    %v1821 = vmul.f32 %v1737, %v1819
    %v1822 = vadd.f32 %v350, %v1821
    %v1823 = vtanh.pop %v1822
    %v1824 = vsub.f32 1.0, %v1747
    %v1825 = vmul.f32 %v1824, %v1823
    %v1826 = vrot.slane %v1583, 7
    %v1828 = vmul.f32 %v1747, %v1826
    %v1829 = vadd.f32 %v1825, %v1828
    %v1831 = vrot.slane %v1829, 5
    %v1832 = vsel %vm366, %v1831, 0
    %1834 = vmatprep.subr.mxu0 0.0
    %1835 = vmatpush1.msra.mxu0 %v353
    %1836 = vmatprep.subr.mxu0 0.0
    %1837 = vmatpush1.msra.mxu0 %v354
    %1838 = vmatprep.subr.mxu0 0.0
    %1839 = vmatpush1.msra.mxu0 %v355
    %1840 = vmatprep.subr.mxu0 0.0
    %1841 = vmatpush1.msra.mxu0 %v356
    %1842 = vmatprep.subr.mxu0 0.0
    %1843 = vmatpush1.msra.mxu0 0.0
    %1844 = vmatprep.subr.mxu0 0.0
    %1845 = vmatpush1.msra.mxu0 0.0
    %1846 = vmatprep.subr.mxu0 0.0
    %1847 = vmatpush1.msra.mxu0 0.0
    %1848 = vmatprep.subr.mxu0 0.0
    %1849 = vmatpush1.msra.mxu0 0.0
    %1850 = vmatprep.subr.mxu0 0.0
    %1851 = vmatpush1.msra.mxu0 0.0
    %1852 = vmatprep.subr.mxu0 0.0
    %1853 = vmatpush1.msra.mxu0 0.0
    %1854 = vmatprep.subr.mxu0 0.0
    %1855 = vmatpush1.msra.mxu0 0.0
    %1856 = vmatprep.subr.mxu0 0.0
    %1857 = vmatpush1.msra.mxu0 0.0
    %1858 = vmatprep.subr.mxu0 0.0
    %1859 = vmatpush1.msra.mxu0 0.0
    %1860 = vmatprep.subr.mxu0 0.0
    %1861 = vmatpush1.msra.mxu0 0.0
    %1862 = vmatprep.subr.mxu0 0.0
    %1863 = vmatpush1.msra.mxu0 0.0
    %1864 = vmatprep.subr.mxu0 0.0
    %1865 = vmatpush1.msra.mxu0 0.0
    %1866 = vmatprep.subr.mxu0 0.0
    %1867 = vmatpush1.msra.mxu0 0.0
    %1868 = vmatprep.subr.mxu0 0.0
    %1869 = vmatpush1.msra.mxu0 0.0
    %1870 = vmatprep.subr.mxu0 0.0
    %1871 = vmatpush1.msra.mxu0 0.0
    %1872 = vmatprep.subr.mxu0 0.0
    %1873 = vmatpush1.msra.mxu0 0.0
    %1874 = vmatprep.subr.mxu0 0.0
    %1875 = vmatpush1.msra.mxu0 0.0
    %1876 = vmatprep.subr.mxu0 0.0
    %1877 = vmatpush1.msra.mxu0 0.0
    %1878 = vmatprep.subr.mxu0 0.0
    %1879 = vmatpush1.msra.mxu0 0.0
    %1880 = vmatprep.subr.mxu0 0.0
    %1881 = vmatpush1.msra.mxu0 0.0
    %1882 = vmatprep.subr.mxu0 0.0
    %1883 = vmatpush1.msra.mxu0 0.0
    %1884 = vmatprep.subr.mxu0 0.0
    %1885 = vmatpush1.msra.mxu0 0.0
    %1886 = vmatprep.subr.mxu0 0.0
    %1887 = vmatpush1.msra.mxu0 0.0
    %1888 = vmatprep.subr.mxu0 0.0
    %1889 = vmatpush1.msra.mxu0 0.0
    %1890 = vmatprep.subr.mxu0 0.0
    %1891 = vmatpush1.msra.mxu0 0.0
    %1892 = vmatprep.subr.mxu0 0.0
    %1893 = vmatpush1.msra.mxu0 0.0
    %1894 = vmatprep.subr.mxu0 0.0
    %1895 = vmatpush1.msra.mxu0 0.0
    %1896 = vmatprep.subr.mxu0 0.0
    %1897 = vmatpush1.msra.mxu0 0.0
    %1898 = vmatprep.mubr.f32.mxu0 0.0
    %1899 = vmatmul.mubr.f32.gmra.mrb[0].mxu0 %v1832
    %v1900 = vpop.f32.mrb[0].mxu0
    %v1901 = vadd.f32 0.0, %v1900
    %v1902 = vpop.f32.mrb[0].mxu0
    %1903 = vdwg.mxu0
    %1904 = vmatprep.subr.mxu0 0.0
    %1905 = vmatpush1.msra.mxu0 %v357
    %1906 = vmatprep.subr.mxu0 0.0
    %1907 = vmatpush1.msra.mxu0 %v358
    %1908 = vmatprep.subr.mxu0 0.0
    %1909 = vmatpush1.msra.mxu0 %v359
    %1910 = vmatprep.subr.mxu0 0.0
    %1911 = vmatpush1.msra.mxu0 %v360
    %1912 = vmatprep.subr.mxu0 0.0
    %1913 = vmatpush1.msra.mxu0 0.0
    %1914 = vmatprep.subr.mxu0 0.0
    %1915 = vmatpush1.msra.mxu0 0.0
    %1916 = vmatprep.subr.mxu0 0.0
    %1917 = vmatpush1.msra.mxu0 0.0
    %1918 = vmatprep.subr.mxu0 0.0
    %1919 = vmatpush1.msra.mxu0 0.0
    %1920 = vmatprep.subr.mxu0 0.0
    %1921 = vmatpush1.msra.mxu0 0.0
    %1922 = vmatprep.subr.mxu0 0.0
    %1923 = vmatpush1.msra.mxu0 0.0
    %1924 = vmatprep.subr.mxu0 0.0
    %1925 = vmatpush1.msra.mxu0 0.0
    %1926 = vmatprep.subr.mxu0 0.0
    %1927 = vmatpush1.msra.mxu0 0.0
    %1928 = vmatprep.subr.mxu0 0.0
    %1929 = vmatpush1.msra.mxu0 0.0
    %1930 = vmatprep.subr.mxu0 0.0
    %1931 = vmatpush1.msra.mxu0 0.0
    %1932 = vmatprep.subr.mxu0 0.0
    %1933 = vmatpush1.msra.mxu0 0.0
    %1934 = vmatprep.subr.mxu0 0.0
    %1935 = vmatpush1.msra.mxu0 0.0
    %1936 = vmatprep.subr.mxu0 0.0
    %1937 = vmatpush1.msra.mxu0 0.0
    %1938 = vmatprep.subr.mxu0 0.0
    %1939 = vmatpush1.msra.mxu0 0.0
    %1940 = vmatprep.subr.mxu0 0.0
    %1941 = vmatpush1.msra.mxu0 0.0
    %1942 = vmatprep.subr.mxu0 0.0
    %1943 = vmatpush1.msra.mxu0 0.0
    %1944 = vmatprep.subr.mxu0 0.0
    %1945 = vmatpush1.msra.mxu0 0.0
    %1946 = vmatprep.subr.mxu0 0.0
    %1947 = vmatpush1.msra.mxu0 0.0
    %1948 = vmatprep.subr.mxu0 0.0
    %1949 = vmatpush1.msra.mxu0 0.0
    %1950 = vmatprep.subr.mxu0 0.0
    %1951 = vmatpush1.msra.mxu0 0.0
    %1952 = vmatprep.subr.mxu0 0.0
    %1953 = vmatpush1.msra.mxu0 0.0
    %1954 = vmatprep.subr.mxu0 0.0
    %1955 = vmatpush1.msra.mxu0 0.0
    %1956 = vmatprep.subr.mxu0 0.0
    %1957 = vmatpush1.msra.mxu0 0.0
    %1958 = vmatprep.subr.mxu0 0.0
    %1959 = vmatpush1.msra.mxu0 0.0
    %1960 = vmatprep.subr.mxu0 0.0
    %1961 = vmatpush1.msra.mxu0 0.0
    %1962 = vmatprep.subr.mxu0 0.0
    %1963 = vmatpush1.msra.mxu0 0.0
    %1964 = vmatprep.subr.mxu0 0.0
    %1965 = vmatpush1.msra.mxu0 0.0
    %1966 = vmatprep.subr.mxu0 0.0
    %1967 = vmatpush1.msra.mxu0 0.0
    %1968 = vmatprep.mubr.f32.mxu0 0.0
    %1969 = vmatmul.mubr.f32.gmra.mrb[0].mxu0 %v1832
    %v1970 = vpop.f32.mrb[0].mxu0
    %v1971 = vadd.f32 0.0, %v1970
    %v1972 = vpop.f32.mrb[0].mxu0
    %1973 = vdwg.mxu0
    %v1975 = vrot.slane %v1901, 2
    %v1977 = vadd.f32 %v192, %v1975
    %v1978 = vxor.u32 %v1977, 2147483648
    %v1979 = vmul.f32 %v1978, 1.442695
    %v1980 = vpow.pop %v1979
    %v1981 = vadd.f32 %v1980, 1.0
    %v1982 = vrcp.pop %v1981
    %v1983 = vmul.f32 1.0, %v1982
    %v1985 = vrot.slane %v1971, 2
    %v1987 = vadd.f32 %v271, %v1985
    %v1988 = vxor.u32 %v1987, 2147483648
    %v1989 = vmul.f32 %v1988, 1.442695
    %v1990 = vpow.pop %v1989
    %v1991 = vadd.f32 %v1990, 1.0
    %v1992 = vrcp.pop %v1991
    %v1993 = vmul.f32 1.0, %v1992
    %1994 = vmatprep.subr.mxu0 0.0
    %1995 = vmatpush1.msra.mxu0 %v361
    %1996 = vmatprep.subr.mxu0 0.0
    %1997 = vmatpush1.msra.mxu0 %v362
    %1998 = vmatprep.subr.mxu0 0.0
    %1999 = vmatpush1.msra.mxu0 %v363
    %2000 = vmatprep.subr.mxu0 0.0
    %2001 = vmatpush1.msra.mxu0 %v364
    %2002 = vmatprep.subr.mxu0 0.0
    %2003 = vmatpush1.msra.mxu0 0.0
    %2004 = vmatprep.subr.mxu0 0.0
    %2005 = vmatpush1.msra.mxu0 0.0
    %2006 = vmatprep.subr.mxu0 0.0
    %2007 = vmatpush1.msra.mxu0 0.0
    %2008 = vmatprep.subr.mxu0 0.0
    %2009 = vmatpush1.msra.mxu0 0.0
    %2010 = vmatprep.subr.mxu0 0.0
    %2011 = vmatpush1.msra.mxu0 0.0
    %2012 = vmatprep.subr.mxu0 0.0
    %2013 = vmatpush1.msra.mxu0 0.0
    %2014 = vmatprep.subr.mxu0 0.0
    %2015 = vmatpush1.msra.mxu0 0.0
    %2016 = vmatprep.subr.mxu0 0.0
    %2017 = vmatpush1.msra.mxu0 0.0
    %2018 = vmatprep.subr.mxu0 0.0
    %2019 = vmatpush1.msra.mxu0 0.0
    %2020 = vmatprep.subr.mxu0 0.0
    %2021 = vmatpush1.msra.mxu0 0.0
    %2022 = vmatprep.subr.mxu0 0.0
    %2023 = vmatpush1.msra.mxu0 0.0
    %2024 = vmatprep.subr.mxu0 0.0
    %2025 = vmatpush1.msra.mxu0 0.0
    %2026 = vmatprep.subr.mxu0 0.0
    %2027 = vmatpush1.msra.mxu0 0.0
    %2028 = vmatprep.subr.mxu0 0.0
    %2029 = vmatpush1.msra.mxu0 0.0
    %2030 = vmatprep.subr.mxu0 0.0
    %2031 = vmatpush1.msra.mxu0 0.0
    %2032 = vmatprep.subr.mxu0 0.0
    %2033 = vmatpush1.msra.mxu0 0.0
    %2034 = vmatprep.subr.mxu0 0.0
    %2035 = vmatpush1.msra.mxu0 0.0
    %2036 = vmatprep.subr.mxu0 0.0
    %2037 = vmatpush1.msra.mxu0 0.0
    %2038 = vmatprep.subr.mxu0 0.0
    %2039 = vmatpush1.msra.mxu0 0.0
    %2040 = vmatprep.subr.mxu0 0.0
    %2041 = vmatpush1.msra.mxu0 0.0
    %2042 = vmatprep.subr.mxu0 0.0
    %2043 = vmatpush1.msra.mxu0 0.0
    %2044 = vmatprep.subr.mxu0 0.0
    %2045 = vmatpush1.msra.mxu0 0.0
    %2046 = vmatprep.subr.mxu0 0.0
    %2047 = vmatpush1.msra.mxu0 0.0
    %2048 = vmatprep.subr.mxu0 0.0
    %2049 = vmatpush1.msra.mxu0 0.0
    %2050 = vmatprep.subr.mxu0 0.0
    %2051 = vmatpush1.msra.mxu0 0.0
    %2052 = vmatprep.subr.mxu0 0.0
    %2053 = vmatpush1.msra.mxu0 0.0
    %2054 = vmatprep.subr.mxu0 0.0
    %2055 = vmatpush1.msra.mxu0 0.0
    %2056 = vmatprep.subr.mxu0 0.0
    %2057 = vmatpush1.msra.mxu0 0.0
    %2058 = vmatprep.mubr.f32.mxu0 0.0
    %2059 = vmatmul.mubr.f32.gmra.mrb[0].mxu0 %v1832
    %v2060 = vpop.f32.mrb[0].mxu0
    %v2061 = vadd.f32 %v365, %v2060
    %v2062 = vpop.f32.mrb[0].mxu0
    %2063 = vdwg.mxu0
    %v2065 = vrot.slane %v2061, 2
    %v2067 = vmul.f32 %v1983, %v2065
    %v2068 = vadd.f32 %v350, %v2067
    %v2069 = vtanh.pop %v2068
    %v2070 = vsub.f32 1.0, %v1993
    %v2071 = vmul.f32 %v2070, %v2069
    %v2072 = vrot.slane %v1829, 7
    %v2074 = vmul.f32 %v1993, %v2072
    %v2075 = vadd.f32 %v2071, %v2074
    %v2077 = vrot.slane %v2075, 6
    %v2078 = vsel %vm366, %v2077, 0
    %2080 = vmatprep.subr.mxu0 0.0
    %2081 = vmatpush1.msra.mxu0 %v353
    %2082 = vmatprep.subr.mxu0 0.0
    %2083 = vmatpush1.msra.mxu0 %v354
    %2084 = vmatprep.subr.mxu0 0.0
    %2085 = vmatpush1.msra.mxu0 %v355
    %2086 = vmatprep.subr.mxu0 0.0
    %2087 = vmatpush1.msra.mxu0 %v356
    %2088 = vmatprep.subr.mxu0 0.0
    %2089 = vmatpush1.msra.mxu0 0.0
    %2090 = vmatprep.subr.mxu0 0.0
    %2091 = vmatpush1.msra.mxu0 0.0
    %2092 = vmatprep.subr.mxu0 0.0
    %2093 = vmatpush1.msra.mxu0 0.0
    %2094 = vmatprep.subr.mxu0 0.0
    %2095 = vmatpush1.msra.mxu0 0.0
    %2096 = vmatprep.subr.mxu0 0.0
    %2097 = vmatpush1.msra.mxu0 0.0
    %2098 = vmatprep.subr.mxu0 0.0
    %2099 = vmatpush1.msra.mxu0 0.0
    %2100 = vmatprep.subr.mxu0 0.0
    %2101 = vmatpush1.msra.mxu0 0.0
    %2102 = vmatprep.subr.mxu0 0.0
    %2103 = vmatpush1.msra.mxu0 0.0
    %2104 = vmatprep.subr.mxu0 0.0
    %2105 = vmatpush1.msra.mxu0 0.0
    %2106 = vmatprep.subr.mxu0 0.0
    %2107 = vmatpush1.msra.mxu0 0.0
    %2108 = vmatprep.subr.mxu0 0.0
    %2109 = vmatpush1.msra.mxu0 0.0
    %2110 = vmatprep.subr.mxu0 0.0
    %2111 = vmatpush1.msra.mxu0 0.0
    %2112 = vmatprep.subr.mxu0 0.0
    %2113 = vmatpush1.msra.mxu0 0.0
    %2114 = vmatprep.subr.mxu0 0.0
    %2115 = vmatpush1.msra.mxu0 0.0
    %2116 = vmatprep.subr.mxu0 0.0
    %2117 = vmatpush1.msra.mxu0 0.0
    %2118 = vmatprep.subr.mxu0 0.0
    %2119 = vmatpush1.msra.mxu0 0.0
    %2120 = vmatprep.subr.mxu0 0.0
    %2121 = vmatpush1.msra.mxu0 0.0
    %2122 = vmatprep.subr.mxu0 0.0
    %2123 = vmatpush1.msra.mxu0 0.0
    %2124 = vmatprep.subr.mxu0 0.0
    %2125 = vmatpush1.msra.mxu0 0.0
    %2126 = vmatprep.subr.mxu0 0.0
    %2127 = vmatpush1.msra.mxu0 0.0
    %2128 = vmatprep.subr.mxu0 0.0
    %2129 = vmatpush1.msra.mxu0 0.0
    %2130 = vmatprep.subr.mxu0 0.0
    %2131 = vmatpush1.msra.mxu0 0.0
    %2132 = vmatprep.subr.mxu0 0.0
    %2133 = vmatpush1.msra.mxu0 0.0
    %2134 = vmatprep.subr.mxu0 0.0
    %2135 = vmatpush1.msra.mxu0 0.0
    %2136 = vmatprep.subr.mxu0 0.0
    %2137 = vmatpush1.msra.mxu0 0.0
    %2138 = vmatprep.subr.mxu0 0.0
    %2139 = vmatpush1.msra.mxu0 0.0
    %2140 = vmatprep.subr.mxu0 0.0
    %2141 = vmatpush1.msra.mxu0 0.0
    %2142 = vmatprep.subr.mxu0 0.0
    %2143 = vmatpush1.msra.mxu0 0.0
    %2144 = vmatprep.mubr.f32.mxu0 0.0
    %2145 = vmatmul.mubr.f32.gmra.mrb[0].mxu0 %v2078
    %v2146 = vpop.f32.mrb[0].mxu0
    %v2147 = vadd.f32 0.0, %v2146
    %v2148 = vpop.f32.mrb[0].mxu0
    %2149 = vdwg.mxu0
    %2150 = vmatprep.subr.mxu0 0.0
    %2151 = vmatpush1.msra.mxu0 %v357
    %2152 = vmatprep.subr.mxu0 0.0
    %2153 = vmatpush1.msra.mxu0 %v358
    %2154 = vmatprep.subr.mxu0 0.0
    %2155 = vmatpush1.msra.mxu0 %v359
    %2156 = vmatprep.subr.mxu0 0.0
    %2157 = vmatpush1.msra.mxu0 %v360
    %2158 = vmatprep.subr.mxu0 0.0
    %2159 = vmatpush1.msra.mxu0 0.0
    %2160 = vmatprep.subr.mxu0 0.0
    %2161 = vmatpush1.msra.mxu0 0.0
    %2162 = vmatprep.subr.mxu0 0.0
    %2163 = vmatpush1.msra.mxu0 0.0
    %2164 = vmatprep.subr.mxu0 0.0
    %2165 = vmatpush1.msra.mxu0 0.0
    %2166 = vmatprep.subr.mxu0 0.0
    %2167 = vmatpush1.msra.mxu0 0.0
    %2168 = vmatprep.subr.mxu0 0.0
    %2169 = vmatpush1.msra.mxu0 0.0
    %2170 = vmatprep.subr.mxu0 0.0
    %2171 = vmatpush1.msra.mxu0 0.0
    %2172 = vmatprep.subr.mxu0 0.0
    %2173 = vmatpush1.msra.mxu0 0.0
    %2174 = vmatprep.subr.mxu0 0.0
    %2175 = vmatpush1.msra.mxu0 0.0
    %2176 = vmatprep.subr.mxu0 0.0
    %2177 = vmatpush1.msra.mxu0 0.0
    %2178 = vmatprep.subr.mxu0 0.0
    %2179 = vmatpush1.msra.mxu0 0.0
    %2180 = vmatprep.subr.mxu0 0.0
    %2181 = vmatpush1.msra.mxu0 0.0
    %2182 = vmatprep.subr.mxu0 0.0
    %2183 = vmatpush1.msra.mxu0 0.0
    %2184 = vmatprep.subr.mxu0 0.0
    %2185 = vmatpush1.msra.mxu0 0.0
    %2186 = vmatprep.subr.mxu0 0.0
    %2187 = vmatpush1.msra.mxu0 0.0
    %2188 = vmatprep.subr.mxu0 0.0
    %2189 = vmatpush1.msra.mxu0 0.0
    %2190 = vmatprep.subr.mxu0 0.0
    %2191 = vmatpush1.msra.mxu0 0.0
    %2192 = vmatprep.subr.mxu0 0.0
    %2193 = vmatpush1.msra.mxu0 0.0
    %2194 = vmatprep.subr.mxu0 0.0
    %2195 = vmatpush1.msra.mxu0 0.0
    %2196 = vmatprep.subr.mxu0 0.0
    %2197 = vmatpush1.msra.mxu0 0.0
    %2198 = vmatprep.subr.mxu0 0.0
    %2199 = vmatpush1.msra.mxu0 0.0
    %2200 = vmatprep.subr.mxu0 0.0
    %2201 = vmatpush1.msra.mxu0 0.0
    %2202 = vmatprep.subr.mxu0 0.0
    %2203 = vmatpush1.msra.mxu0 0.0
    %2204 = vmatprep.subr.mxu0 0.0
    %2205 = vmatpush1.msra.mxu0 0.0
    %2206 = vmatprep.subr.mxu0 0.0
    %2207 = vmatpush1.msra.mxu0 0.0
    %2208 = vmatprep.subr.mxu0 0.0
    %2209 = vmatpush1.msra.mxu0 0.0
    %2210 = vmatprep.subr.mxu0 0.0
    %2211 = vmatpush1.msra.mxu0 0.0
    %2212 = vmatprep.subr.mxu0 0.0
    %2213 = vmatpush1.msra.mxu0 0.0
    %2214 = vmatprep.mubr.f32.mxu0 0.0
    %2215 = vmatmul.mubr.f32.gmra.mrb[0].mxu0 %v2078
    %v2216 = vpop.f32.mrb[0].mxu0
    %v2217 = vadd.f32 0.0, %v2216
    %v2218 = vpop.f32.mrb[0].mxu0
    %2219 = vdwg.mxu0
    %v2221 = vrot.slane %v2147, 1
    %v2223 = vadd.f32 %v192, %v2221
    %v2224 = vxor.u32 %v2223, 2147483648
    %v2225 = vmul.f32 %v2224, 1.442695
    %v2226 = vpow.pop %v2225
    %v2227 = vadd.f32 %v2226, 1.0
    %v2228 = vrcp.pop %v2227
    %v2229 = vmul.f32 1.0, %v2228
    %v2231 = vrot.slane %v2217, 1
    %v2233 = vadd.f32 %v271, %v2231
    %v2234 = vxor.u32 %v2233, 2147483648
    %v2235 = vmul.f32 %v2234, 1.442695
    %v2236 = vpow.pop %v2235
    %v2237 = vadd.f32 %v2236, 1.0
    %v2238 = vrcp.pop %v2237
    %v2239 = vmul.f32 1.0, %v2238
    %2240 = vmatprep.subr.mxu0 0.0
    %2241 = vmatpush1.msra.mxu0 %v361
    %2242 = vmatprep.subr.mxu0 0.0
    %2243 = vmatpush1.msra.mxu0 %v362
    %2244 = vmatprep.subr.mxu0 0.0
    %2245 = vmatpush1.msra.mxu0 %v363
    %2246 = vmatprep.subr.mxu0 0.0
    %2247 = vmatpush1.msra.mxu0 %v364
    %2248 = vmatprep.subr.mxu0 0.0
    %2249 = vmatpush1.msra.mxu0 0.0
    %2250 = vmatprep.subr.mxu0 0.0
    %2251 = vmatpush1.msra.mxu0 0.0
    %2252 = vmatprep.subr.mxu0 0.0
    %2253 = vmatpush1.msra.mxu0 0.0
    %2254 = vmatprep.subr.mxu0 0.0
    %2255 = vmatpush1.msra.mxu0 0.0
    %2256 = vmatprep.subr.mxu0 0.0
    %2257 = vmatpush1.msra.mxu0 0.0
    %2258 = vmatprep.subr.mxu0 0.0
    %2259 = vmatpush1.msra.mxu0 0.0
    %2260 = vmatprep.subr.mxu0 0.0
    %2261 = vmatpush1.msra.mxu0 0.0
    %2262 = vmatprep.subr.mxu0 0.0
    %2263 = vmatpush1.msra.mxu0 0.0
    %2264 = vmatprep.subr.mxu0 0.0
    %2265 = vmatpush1.msra.mxu0 0.0
    %2266 = vmatprep.subr.mxu0 0.0
    %2267 = vmatpush1.msra.mxu0 0.0
    %2268 = vmatprep.subr.mxu0 0.0
    %2269 = vmatpush1.msra.mxu0 0.0
    %2270 = vmatprep.subr.mxu0 0.0
    %2271 = vmatpush1.msra.mxu0 0.0
    %2272 = vmatprep.subr.mxu0 0.0
    %2273 = vmatpush1.msra.mxu0 0.0
    %2274 = vmatprep.subr.mxu0 0.0
    %2275 = vmatpush1.msra.mxu0 0.0
    %2276 = vmatprep.subr.mxu0 0.0
    %2277 = vmatpush1.msra.mxu0 0.0
    %2278 = vmatprep.subr.mxu0 0.0
    %2279 = vmatpush1.msra.mxu0 0.0
    %2280 = vmatprep.subr.mxu0 0.0
    %2281 = vmatpush1.msra.mxu0 0.0
    %2282 = vmatprep.subr.mxu0 0.0
    %2283 = vmatpush1.msra.mxu0 0.0
    %2284 = vmatprep.subr.mxu0 0.0
    %2285 = vmatpush1.msra.mxu0 0.0
    %2286 = vmatprep.subr.mxu0 0.0
    %2287 = vmatpush1.msra.mxu0 0.0
    %2288 = vmatprep.subr.mxu0 0.0
    %2289 = vmatpush1.msra.mxu0 0.0
    %2290 = vmatprep.subr.mxu0 0.0
    %2291 = vmatpush1.msra.mxu0 0.0
    %2292 = vmatprep.subr.mxu0 0.0
    %2293 = vmatpush1.msra.mxu0 0.0
    %2294 = vmatprep.subr.mxu0 0.0
    %2295 = vmatpush1.msra.mxu0 0.0
    %2296 = vmatprep.subr.mxu0 0.0
    %2297 = vmatpush1.msra.mxu0 0.0
    %2298 = vmatprep.subr.mxu0 0.0
    %2299 = vmatpush1.msra.mxu0 0.0
    %2300 = vmatprep.subr.mxu0 0.0
    %2301 = vmatpush1.msra.mxu0 0.0
    %2302 = vmatprep.subr.mxu0 0.0
    %2303 = vmatpush1.msra.mxu0 0.0
    %2304 = vmatprep.mubr.f32.mxu0 0.0
    %2305 = vmatmul.mubr.f32.gmra.mrb[0].mxu0 %v2078
    %v2306 = vpop.f32.mrb[0].mxu0
    %v2307 = vadd.f32 %v365, %v2306
    %v2308 = vpop.f32.mrb[0].mxu0
    %2309 = vdwg.mxu0
    %v2311 = vrot.slane %v2307, 1
    %v2313 = vmul.f32 %v2229, %v2311
    %v2314 = vadd.f32 %v350, %v2313
    %v2315 = vtanh.pop %v2314
    %v2316 = vsub.f32 1.0, %v2239
    %v2317 = vmul.f32 %v2316, %v2315
    %v2318 = vrot.slane %v2075, 7
    %v2320 = vmul.f32 %v2239, %v2318
    %v2321 = vadd.f32 %v2317, %v2320
    %v2322 = vld [vmem:[%s11] sm:$0xff]
    %v2323 = vld [vmem:[%s11 + $0x8] sm:$0xff]
    %v2324 = vld [vmem:[%s11 + $0x10] sm:$0xff]
    %v2325 = vld [vmem:[%s11 + $0x18] sm:$0xff]
    %v2326 = vld [vmem:[%s12] sm:$0x1]
    %v2328 = vrot.slane %v2321, 7
    %v2329 = vsel %vm366, %v2328, 0
    %2331 = vmatprep.subr.mxu0 0.0
    %2332 = vmatpush1.msra.mxu0 %v2322
    %2333 = vmatprep.subr.mxu0 0.0
    %2334 = vmatpush1.msra.mxu0 %v2323
    %2335 = vmatprep.subr.mxu0 0.0
    %2336 = vmatpush1.msra.mxu0 %v2324
    %2337 = vmatprep.subr.mxu0 0.0
    %2338 = vmatpush1.msra.mxu0 %v2325
    %2339 = vmatprep.subr.mxu0 0.0
    %2340 = vmatpush1.msra.mxu0 0.0
    %2341 = vmatprep.subr.mxu0 0.0
    %2342 = vmatpush1.msra.mxu0 0.0
    %2343 = vmatprep.subr.mxu0 0.0
    %2344 = vmatpush1.msra.mxu0 0.0
    %2345 = vmatprep.subr.mxu0 0.0
    %2346 = vmatpush1.msra.mxu0 0.0
    %2347 = vmatprep.subr.mxu0 0.0
    %2348 = vmatpush1.msra.mxu0 0.0
    %2349 = vmatprep.subr.mxu0 0.0
    %2350 = vmatpush1.msra.mxu0 0.0
    %2351 = vmatprep.subr.mxu0 0.0
    %2352 = vmatpush1.msra.mxu0 0.0
    %2353 = vmatprep.subr.mxu0 0.0
    %2354 = vmatpush1.msra.mxu0 0.0
    %2355 = vmatprep.subr.mxu0 0.0
    %2356 = vmatpush1.msra.mxu0 0.0
    %2357 = vmatprep.subr.mxu0 0.0
    %2358 = vmatpush1.msra.mxu0 0.0
    %2359 = vmatprep.subr.mxu0 0.0
    %2360 = vmatpush1.msra.mxu0 0.0
    %2361 = vmatprep.subr.mxu0 0.0
    %2362 = vmatpush1.msra.mxu0 0.0
    %2363 = vmatprep.subr.mxu0 0.0
    %2364 = vmatpush1.msra.mxu0 0.0
    %2365 = vmatprep.subr.mxu0 0.0
    %2366 = vmatpush1.msra.mxu0 0.0
    %2367 = vmatprep.subr.mxu0 0.0
    %2368 = vmatpush1.msra.mxu0 0.0
    %2369 = vmatprep.subr.mxu0 0.0
    %2370 = vmatpush1.msra.mxu0 0.0
    %2371 = vmatprep.subr.mxu0 0.0
    %2372 = vmatpush1.msra.mxu0 0.0
    %2373 = vmatprep.subr.mxu0 0.0
    %2374 = vmatpush1.msra.mxu0 0.0
    %2375 = vmatprep.subr.mxu0 0.0
    %2376 = vmatpush1.msra.mxu0 0.0
    %2377 = vmatprep.subr.mxu0 0.0
    %2378 = vmatpush1.msra.mxu0 0.0
    %2379 = vmatprep.subr.mxu0 0.0
    %2380 = vmatpush1.msra.mxu0 0.0
    %2381 = vmatprep.subr.mxu0 0.0
    %2382 = vmatpush1.msra.mxu0 0.0
    %2383 = vmatprep.subr.mxu0 0.0
    %2384 = vmatpush1.msra.mxu0 0.0
    %2385 = vmatprep.subr.mxu0 0.0
    %2386 = vmatpush1.msra.mxu0 0.0
    %2387 = vmatprep.subr.mxu0 0.0
    %2388 = vmatpush1.msra.mxu0 0.0
    %2389 = vmatprep.subr.mxu0 0.0
    %2390 = vmatpush1.msra.mxu0 0.0
    %2391 = vmatprep.subr.mxu0 0.0
    %2392 = vmatpush1.msra.mxu0 0.0
    %2393 = vmatprep.subr.mxu0 0.0
    %2394 = vmatpush1.msra.mxu0 0.0
    %2395 = vmatprep.mubr.f32.mxu0 0.0
    %2396 = vmatmul.mubr.f32.gmra.mrb[0].mxu0 %v2329
    %v2397 = vpop.f32.mrb[0].mxu0
    %v2398 = vadd.f32 %v2326, %v2397
    %v2399 = vpop.f32.mrb[0].mxu0
    %2400 = vdwg.mxu0
    %vm2401 = vcmask 57344
    %2402 = vst.msk [vmem:[#allocation11] sm:$0x1] %vm2401, %v2398
    // Predicated region
    $region74: #{tpu_custom_call.1} parent=1 // pred_check
      _
    $region75: #{tpu_custom_call.1} parent=1 // pred_check_branch
      %2404 = sbr.rel (0) target = $region77
    $region76: #{tpu_custom_call.1} parent=1 // pred_region
      %s2406 = ssub.s32 16, 16
      %2407 = vsyncadd [#allocation4], %s2406
      %s2409 = sshll.u32 [#allocation11], 4
      %s2410 = int_to_ptr.vmem [resolvable:$true] %s2409
      %2412 = dma.vmem_to_hbm [thread:$0]  %s2410, 16, %s13, [#allocation4]
    $region77: #{tpu_custom_call.1} parent=1 // pred_fallthru
      _
    // Predicated region
    $region78: #{tpu_custom_call.1} parent=1 // pred_check
      _
    $region79: #{tpu_custom_call.1} parent=1 // pred_check_branch
      %2414 = sbr.rel (0) target = $region81
    $region80: #{tpu_custom_call.1} parent=1 // pred_region
      %2415 = dma.done [#allocation4], 16
    $region81: #{tpu_custom_call.1} parent=1 // pred_fallthru
      _
    %2416 = vsyncpa [#allocation3], 1
    %2417 = vsyncpa [#allocation6], 1
    %2418 = vsyncpa [#allocation9], 1
    %2419 = vsyncpa [#allocation4], 1

</llo_original>
